<compile_context>
chip_gen: v6e
topology: v6e:2x2x1
jax: 0.10.0
libtpu: 0.0.40
codegen_flags: <defaults>
</compile_context>

<pallas_src>
import functools
import math

import jax
import jax.numpy as jnp
from jax.experimental import pallas as pl
from jax.experimental.pallas import tpu as pltpu


def _round_up(v, m):
    return (v + m - 1) // m * m


def _sublanes(itemsize):
    # f32 -> 8, bf16 -> 16, int8 -> 32 (sub-32-bit dtypes pack along sublanes).
    return max(8, 32 // max(1, itemsize))


def _spatial_attention_kernel(w_ref, b_ref, x_ref, o_ref, pad_ref, *,
                              C, W, HW, HWp, K, bn, LTOT):
    P = K // 2
    Loff = P * W + P            # interior offset => tap (dh, dw) starts at dh*W + dw
    inv_c = 1.0 / C

    # Hoist the 2*K*K scalar weights (SMEM reads) and the bias out of the loops.
    wts = [[[w_ref[c * K * K + dh * K + dw] for dw in range(K)]
            for dh in range(K)] for c in range(2)]
    bias = b_ref[0]

    # Zero only the halos, every grid step (megacore-safe: scratch is per-core
    # and the interior is fully overwritten below; halos stay zero).
    pad_ref[:, :, 0:Loff] = jnp.zeros((2, bn, Loff), jnp.float32)
    pad_ref[:, :, Loff + HW:LTOT] = jnp.zeros((2, bn, LTOT - Loff - HW), jnp.float32)

    # Batched, lane-dense channel reduction over the whole block
    # (torch.max / torch.mean over dim=1).
    xf = x_ref[...].astype(jnp.float32)          # (bn, C, HWp), upcast in-kernel
    max_r = jnp.max(xf, axis=1)                  # (bn, HWp)
    avg_r = jnp.sum(xf, axis=1) * inv_c          # (bn, HWp)
    pad_ref[0, :, Loff:Loff + HW] = max_r[:, :HW]
    pad_ref[1, :, Loff:Loff + HW] = avg_r[:, :HW]

    # Column index (w) of every flat output position, for masking taps that
    # would wrap across a row boundary in the flat layout.  Hoisted.
    col = jax.lax.broadcasted_iota(jnp.int32, (bn, HW), 1) % W

    # 7x7 conv (2 -> 1 channel, "same" zero padding), flat layout:
    #   out[s] = bias + sum_{c,dh,dw} w[c,dh,dw] * pad_c[dh*W + dw + s] * mask_dw(s)
    # Row (h) overflow reads the zero halos; column (w) overflow is masked once
    # per dw and shared across the K dh taps.
    acc = jnp.full((bn, HW), bias, dtype=jnp.float32)
    for c in range(2):
        for dw in range(K):
            inner = wts[c][0][dw] * pad_ref[c, :, dw:dw + HW]
            for dh in range(1, K):
                start = dh * W + dw
                inner = inner + wts[c][dh][dw] * pad_ref[c, :, start:start + HW]
            if dw == P:
                acc = acc + inner                # center column: mask is all-true
            else:
                mask = (col >= P - dw) & (col < W + P - dw)
                acc = acc + jnp.where(mask, inner, 0.0)

    o_ref[:, 0, 0:HW] = jax.nn.sigmoid(acc).astype(o_ref.dtype)
    if HWp > HW:
        o_ref[:, 0, HW:HWp] = jnp.zeros((bn, HWp - HW), o_ref.dtype)


def _vmem_capacity_bytes():
    try:
        info = pltpu.get_tpu_info()
        cap = getattr(info, "vmem_capacity_bytes", None)
        if cap:
            return int(cap)
    except Exception:
        pass
    return 64 << 20           # conservative fallback: v7x per-core VMEM


def _pick_block_n(n, per_image_bytes, budget_bytes, max_bn=256):
    """Largest divisor of n fitting the budget; prefer an even number of grid
    steps (>= 2) so the 'parallel' batch axis splits across v7x's two TCs."""
    cap = max(1, min(max_bn, budget_bytes // max(1, per_image_bytes)))
    divisors = [d for d in range(1, n + 1) if n % d == 0 and d <= cap]
    even_steps = [d for d in divisors if (n // d) >= 2 and (n // d) % 2 == 0]
    multi_steps = [d for d in divisors if (n // d) >= 2]
    if even_steps:
        return max(even_steps)
    if multi_steps:
        return max(multi_steps)
    return max(divisors)


def spatial_attention(x, weight, bias, kernel_size=7):
    """x: (N, C, H, W). weight: (1, 2, K, K). bias: (1,). Returns (N, 1, H, W), x.dtype."""
    N, C, H, W = x.shape
    K = kernel_size
    P = K // 2
    HW = H * W
    HWp = _round_up(HW, 128)                       # lane-dense flat spatial dim
    LTOT = _round_up(HW + 2 * P * W + 2 * P, 128)  # flat scratch (with zero halos)

    out_dtype = x.dtype

    # Lane-dense input: contiguous reshape (free at the XLA level), lane-pad if needed.
    x_flat = x.reshape(N, C, HW)
    if HWp != HW:
        x_flat = jnp.pad(x_flat, ((0, 0), (0, 0), (0, HWp - HW)))

    w_flat = weight.reshape(-1).astype(jnp.float32)     # (2*K*K,) scalars -> SMEM
    b = bias.reshape(1).astype(jnp.float32)

    # Padding-aware per-image VMEM estimate (sublane/lane padded layouts,
    # double-buffered in/out blocks, plus the in-kernel f32 working copy).
    in_itemsize = x.dtype.itemsize
    out_itemsize = jnp.dtype(out_dtype).itemsize
    c_in_pad = _round_up(C, _sublanes(in_itemsize))
    c_f32_pad = _round_up(C, 8)
    in_block = c_in_pad * HWp * in_itemsize
    out_block = _sublanes(out_itemsize) * HWp * out_itemsize
    work = (c_f32_pad + 8) * HWp * 4                    # f32 upcast + reduction/acc temps
    per_image = 2 * (in_block + out_block) + work

    vmem_cap = _vmem_capacity_bytes()
    if vmem_cap <= (64 << 20):                          # v7x-class: 64 MiB / core
        limit_cap, budget = 40 << 20, 18 << 20
    else:                                               # v5e / v6e: 128 MiB
        limit_cap, budget = 100 << 20, 64 << 20

    bn = _pick_block_n(N, per_image, budget)
    scratch_bytes = 2 * _round_up(bn, 8) * LTOT * 4
    vmem_limit = int(min(limit_cap, max(16 << 20, 2 * (bn * per_image + scratch_bytes))))

    kernel = functools.partial(_spatial_attention_kernel,
                               C=C, W=W, HW=HW, HWp=HWp, K=K, bn=bn, LTOT=LTOT)

    out_flat = pl.pallas_call(
        kernel,
        out_shape=jax.ShapeDtypeStruct((N, 1, HWp), out_dtype),
        grid=(N // bn,),
        in_specs=[
            pl.BlockSpec(memory_space=pltpu.MemorySpace.SMEM),      # conv weights
            pl.BlockSpec(memory_space=pltpu.MemorySpace.SMEM),      # conv bias
            pl.BlockSpec((bn, C, HWp), lambda n: (n, 0, 0)),        # x block, lane dense
        ],
        out_specs=pl.BlockSpec((bn, 1, HWp), lambda n: (n, 0, 0)),  # lane-dense output
        scratch_shapes=[pltpu.VMEM((2, bn, LTOT), jnp.float32)],
        compiler_params=pltpu.CompilerParams(
            dimension_semantics=("parallel",),
            vmem_limit_bytes=vmem_limit),
    )(w_flat, b, x_flat)

    return out_flat[:, :, :HW].reshape(N, 1, H, W)


def _reference(x, weight, bias):
    K = weight.shape[-1]
    P = K // 2
    max_r = jnp.max(x, axis=1, keepdims=True)
    avg_r = jnp.mean(x, axis=1, keepdims=True)
    res = jnp.concatenate([max_r, avg_r], axis=1)
    out = jax.lax.conv_general_dilated(
        res, weight, window_strides=(1, 1), padding=[(P, P), (P, P)],
        dimension_numbers=("NCHW", "OIHW", "NCHW"))
    return jax.nn.sigmoid(out + bias.reshape(1, 1, 1, 1))


if __name__ == "__main__":
    key = jax.random.PRNGKey(0)
    kx, kw, kb = jax.random.split(key, 3)

    N, C, H, W = 2, 4, 16, 16
    K = 7

    x = jax.random.normal(kx, (N, C, H, W), dtype=jnp.float32)

    # Deterministic Conv2d(2, 1, k=7) init (kaiming-uniform-style bounds).
    fan_in = 2 * K * K
    bound = 1.0 / math.sqrt(fan_in)
    weight = jax.random.uniform(kw, (1, 2, K, K), jnp.float32, -bound, bound)
    bias = jax.random.uniform(kb, (1,), jnp.float32, -bound, bound)

    out = spatial_attention(x, weight, bias, kernel_size=K)
    out = jax.block_until_ready(out)

    ref = _reference(x, weight, bias)
    assert out.shape == (N, 1, H, W)
    assert out.dtype == x.dtype
    assert jnp.allclose(out, ref, atol=1e-5, rtol=1e-5), "mismatch vs reference"

    print("KERNEL_OK")
</pallas_src>

<mosaic_0001>
module attributes {stable_mosaic.version = 11 : i64} {
  func.func @_spatial_attention_kernel(%arg0: i32, %arg1: memref<98xf32, #tpu.memory_space<smem>>, %arg2: memref<1xf32, #tpu.memory_space<smem>>, %arg3: memref<1x4x256xf32, #tpu.memory_space<vmem>>, %arg4: memref<1x1x256xf32, #tpu.memory_space<vmem>>, %arg5: memref<2x1x384xf32, #tpu.memory_space<vmem>>) attributes {dimension_semantics = [#tpu.dimension_semantics<parallel>], iteration_bounds = array<i64: 2>, scalar_prefetch = 0 : i64, scratch_operands = 1 : i64, tpu.core_type = #tpu.core_type<tc>, window_params = [{transform_indices = @transform_0, window_bounds = array<i64: 98>}, {transform_indices = @transform_1, window_bounds = array<i64: 1>}, {transform_indices = @transform_2, window_bounds = array<i64: 1, 4, 256>}, {transform_indices = @transform_3, window_bounds = array<i64: 1, 1, 256>}]} {
    %c0 = arith.constant 0 : index
    %0 = memref.load %arg1[%c0] : memref<98xf32, #tpu.memory_space<smem>>
    %c1 = arith.constant 1 : index
    %1 = memref.load %arg1[%c1] : memref<98xf32, #tpu.memory_space<smem>>
    %c2 = arith.constant 2 : index
    %2 = memref.load %arg1[%c2] : memref<98xf32, #tpu.memory_space<smem>>
    %c3 = arith.constant 3 : index
    %3 = memref.load %arg1[%c3] : memref<98xf32, #tpu.memory_space<smem>>
    %c4 = arith.constant 4 : index
    %4 = memref.load %arg1[%c4] : memref<98xf32, #tpu.memory_space<smem>>
    %c5 = arith.constant 5 : index
    %5 = memref.load %arg1[%c5] : memref<98xf32, #tpu.memory_space<smem>>
    %c6 = arith.constant 6 : index
    %6 = memref.load %arg1[%c6] : memref<98xf32, #tpu.memory_space<smem>>
    %c7 = arith.constant 7 : index
    %7 = memref.load %arg1[%c7] : memref<98xf32, #tpu.memory_space<smem>>
    %c8 = arith.constant 8 : index
    %8 = memref.load %arg1[%c8] : memref<98xf32, #tpu.memory_space<smem>>
    %c9 = arith.constant 9 : index
    %9 = memref.load %arg1[%c9] : memref<98xf32, #tpu.memory_space<smem>>
    %c10 = arith.constant 10 : index
    %10 = memref.load %arg1[%c10] : memref<98xf32, #tpu.memory_space<smem>>
    %c11 = arith.constant 11 : index
    %11 = memref.load %arg1[%c11] : memref<98xf32, #tpu.memory_space<smem>>
    %c12 = arith.constant 12 : index
    %12 = memref.load %arg1[%c12] : memref<98xf32, #tpu.memory_space<smem>>
    %c13 = arith.constant 13 : index
    %13 = memref.load %arg1[%c13] : memref<98xf32, #tpu.memory_space<smem>>
    %c14 = arith.constant 14 : index
    %14 = memref.load %arg1[%c14] : memref<98xf32, #tpu.memory_space<smem>>
    %c15 = arith.constant 15 : index
    %15 = memref.load %arg1[%c15] : memref<98xf32, #tpu.memory_space<smem>>
    %c16 = arith.constant 16 : index
    %16 = memref.load %arg1[%c16] : memref<98xf32, #tpu.memory_space<smem>>
    %c17 = arith.constant 17 : index
    %17 = memref.load %arg1[%c17] : memref<98xf32, #tpu.memory_space<smem>>
    %c18 = arith.constant 18 : index
    %18 = memref.load %arg1[%c18] : memref<98xf32, #tpu.memory_space<smem>>
    %c19 = arith.constant 19 : index
    %19 = memref.load %arg1[%c19] : memref<98xf32, #tpu.memory_space<smem>>
    %c20 = arith.constant 20 : index
    %20 = memref.load %arg1[%c20] : memref<98xf32, #tpu.memory_space<smem>>
    %c21 = arith.constant 21 : index
    %21 = memref.load %arg1[%c21] : memref<98xf32, #tpu.memory_space<smem>>
    %c22 = arith.constant 22 : index
    %22 = memref.load %arg1[%c22] : memref<98xf32, #tpu.memory_space<smem>>
    %c23 = arith.constant 23 : index
    %23 = memref.load %arg1[%c23] : memref<98xf32, #tpu.memory_space<smem>>
    %c24 = arith.constant 24 : index
    %24 = memref.load %arg1[%c24] : memref<98xf32, #tpu.memory_space<smem>>
    %c25 = arith.constant 25 : index
    %25 = memref.load %arg1[%c25] : memref<98xf32, #tpu.memory_space<smem>>
    %c26 = arith.constant 26 : index
    %26 = memref.load %arg1[%c26] : memref<98xf32, #tpu.memory_space<smem>>
    %c27 = arith.constant 27 : index
    %27 = memref.load %arg1[%c27] : memref<98xf32, #tpu.memory_space<smem>>
    %c28 = arith.constant 28 : index
    %28 = memref.load %arg1[%c28] : memref<98xf32, #tpu.memory_space<smem>>
    %c29 = arith.constant 29 : index
    %29 = memref.load %arg1[%c29] : memref<98xf32, #tpu.memory_space<smem>>
    %c30 = arith.constant 30 : index
    %30 = memref.load %arg1[%c30] : memref<98xf32, #tpu.memory_space<smem>>
    %c31 = arith.constant 31 : index
    %31 = memref.load %arg1[%c31] : memref<98xf32, #tpu.memory_space<smem>>
    %c32 = arith.constant 32 : index
    %32 = memref.load %arg1[%c32] : memref<98xf32, #tpu.memory_space<smem>>
    %c33 = arith.constant 33 : index
    %33 = memref.load %arg1[%c33] : memref<98xf32, #tpu.memory_space<smem>>
    %c34 = arith.constant 34 : index
    %34 = memref.load %arg1[%c34] : memref<98xf32, #tpu.memory_space<smem>>
    %c35 = arith.constant 35 : index
    %35 = memref.load %arg1[%c35] : memref<98xf32, #tpu.memory_space<smem>>
    %c36 = arith.constant 36 : index
    %36 = memref.load %arg1[%c36] : memref<98xf32, #tpu.memory_space<smem>>
    %c37 = arith.constant 37 : index
    %37 = memref.load %arg1[%c37] : memref<98xf32, #tpu.memory_space<smem>>
    %c38 = arith.constant 38 : index
    %38 = memref.load %arg1[%c38] : memref<98xf32, #tpu.memory_space<smem>>
    %c39 = arith.constant 39 : index
    %39 = memref.load %arg1[%c39] : memref<98xf32, #tpu.memory_space<smem>>
    %c40 = arith.constant 40 : index
    %40 = memref.load %arg1[%c40] : memref<98xf32, #tpu.memory_space<smem>>
    %c41 = arith.constant 41 : index
    %41 = memref.load %arg1[%c41] : memref<98xf32, #tpu.memory_space<smem>>
    %c42 = arith.constant 42 : index
    %42 = memref.load %arg1[%c42] : memref<98xf32, #tpu.memory_space<smem>>
    %c43 = arith.constant 43 : index
    %43 = memref.load %arg1[%c43] : memref<98xf32, #tpu.memory_space<smem>>
    %c44 = arith.constant 44 : index
    %44 = memref.load %arg1[%c44] : memref<98xf32, #tpu.memory_space<smem>>
    %c45 = arith.constant 45 : index
    %45 = memref.load %arg1[%c45] : memref<98xf32, #tpu.memory_space<smem>>
    %c46 = arith.constant 46 : index
    %46 = memref.load %arg1[%c46] : memref<98xf32, #tpu.memory_space<smem>>
    %c47 = arith.constant 47 : index
    %47 = memref.load %arg1[%c47] : memref<98xf32, #tpu.memory_space<smem>>
    %c48 = arith.constant 48 : index
    %48 = memref.load %arg1[%c48] : memref<98xf32, #tpu.memory_space<smem>>
    %c49 = arith.constant 49 : index
    %49 = memref.load %arg1[%c49] : memref<98xf32, #tpu.memory_space<smem>>
    %c50 = arith.constant 50 : index
    %50 = memref.load %arg1[%c50] : memref<98xf32, #tpu.memory_space<smem>>
    %c51 = arith.constant 51 : index
    %51 = memref.load %arg1[%c51] : memref<98xf32, #tpu.memory_space<smem>>
    %c52 = arith.constant 52 : index
    %52 = memref.load %arg1[%c52] : memref<98xf32, #tpu.memory_space<smem>>
    %c53 = arith.constant 53 : index
    %53 = memref.load %arg1[%c53] : memref<98xf32, #tpu.memory_space<smem>>
    %c54 = arith.constant 54 : index
    %54 = memref.load %arg1[%c54] : memref<98xf32, #tpu.memory_space<smem>>
    %c55 = arith.constant 55 : index
    %55 = memref.load %arg1[%c55] : memref<98xf32, #tpu.memory_space<smem>>
    %c56 = arith.constant 56 : index
    %56 = memref.load %arg1[%c56] : memref<98xf32, #tpu.memory_space<smem>>
    %c57 = arith.constant 57 : index
    %57 = memref.load %arg1[%c57] : memref<98xf32, #tpu.memory_space<smem>>
    %c58 = arith.constant 58 : index
    %58 = memref.load %arg1[%c58] : memref<98xf32, #tpu.memory_space<smem>>
    %c59 = arith.constant 59 : index
    %59 = memref.load %arg1[%c59] : memref<98xf32, #tpu.memory_space<smem>>
    %c60 = arith.constant 60 : index
    %60 = memref.load %arg1[%c60] : memref<98xf32, #tpu.memory_space<smem>>
    %c61 = arith.constant 61 : index
    %61 = memref.load %arg1[%c61] : memref<98xf32, #tpu.memory_space<smem>>
    %c62 = arith.constant 62 : index
    %62 = memref.load %arg1[%c62] : memref<98xf32, #tpu.memory_space<smem>>
    %c63 = arith.constant 63 : index
    %63 = memref.load %arg1[%c63] : memref<98xf32, #tpu.memory_space<smem>>
    %c64 = arith.constant 64 : index
    %64 = memref.load %arg1[%c64] : memref<98xf32, #tpu.memory_space<smem>>
    %c65 = arith.constant 65 : index
    %65 = memref.load %arg1[%c65] : memref<98xf32, #tpu.memory_space<smem>>
    %c66 = arith.constant 66 : index
    %66 = memref.load %arg1[%c66] : memref<98xf32, #tpu.memory_space<smem>>
    %c67 = arith.constant 67 : index
    %67 = memref.load %arg1[%c67] : memref<98xf32, #tpu.memory_space<smem>>
    %c68 = arith.constant 68 : index
    %68 = memref.load %arg1[%c68] : memref<98xf32, #tpu.memory_space<smem>>
    %c69 = arith.constant 69 : index
    %69 = memref.load %arg1[%c69] : memref<98xf32, #tpu.memory_space<smem>>
    %c70 = arith.constant 70 : index
    %70 = memref.load %arg1[%c70] : memref<98xf32, #tpu.memory_space<smem>>
    %c71 = arith.constant 71 : index
    %71 = memref.load %arg1[%c71] : memref<98xf32, #tpu.memory_space<smem>>
    %c72 = arith.constant 72 : index
    %72 = memref.load %arg1[%c72] : memref<98xf32, #tpu.memory_space<smem>>
    %c73 = arith.constant 73 : index
    %73 = memref.load %arg1[%c73] : memref<98xf32, #tpu.memory_space<smem>>
    %c74 = arith.constant 74 : index
    %74 = memref.load %arg1[%c74] : memref<98xf32, #tpu.memory_space<smem>>
    %c75 = arith.constant 75 : index
    %75 = memref.load %arg1[%c75] : memref<98xf32, #tpu.memory_space<smem>>
    %c76 = arith.constant 76 : index
    %76 = memref.load %arg1[%c76] : memref<98xf32, #tpu.memory_space<smem>>
    %c77 = arith.constant 77 : index
    %77 = memref.load %arg1[%c77] : memref<98xf32, #tpu.memory_space<smem>>
    %c78 = arith.constant 78 : index
    %78 = memref.load %arg1[%c78] : memref<98xf32, #tpu.memory_space<smem>>
    %c79 = arith.constant 79 : index
    %79 = memref.load %arg1[%c79] : memref<98xf32, #tpu.memory_space<smem>>
    %c80 = arith.constant 80 : index
    %80 = memref.load %arg1[%c80] : memref<98xf32, #tpu.memory_space<smem>>
    %c81 = arith.constant 81 : index
    %81 = memref.load %arg1[%c81] : memref<98xf32, #tpu.memory_space<smem>>
    %c82 = arith.constant 82 : index
    %82 = memref.load %arg1[%c82] : memref<98xf32, #tpu.memory_space<smem>>
    %c83 = arith.constant 83 : index
    %83 = memref.load %arg1[%c83] : memref<98xf32, #tpu.memory_space<smem>>
    %c84 = arith.constant 84 : index
    %84 = memref.load %arg1[%c84] : memref<98xf32, #tpu.memory_space<smem>>
    %c85 = arith.constant 85 : index
    %85 = memref.load %arg1[%c85] : memref<98xf32, #tpu.memory_space<smem>>
    %c86 = arith.constant 86 : index
    %86 = memref.load %arg1[%c86] : memref<98xf32, #tpu.memory_space<smem>>
    %c87 = arith.constant 87 : index
    %87 = memref.load %arg1[%c87] : memref<98xf32, #tpu.memory_space<smem>>
    %c88 = arith.constant 88 : index
    %88 = memref.load %arg1[%c88] : memref<98xf32, #tpu.memory_space<smem>>
    %c89 = arith.constant 89 : index
    %89 = memref.load %arg1[%c89] : memref<98xf32, #tpu.memory_space<smem>>
    %c90 = arith.constant 90 : index
    %90 = memref.load %arg1[%c90] : memref<98xf32, #tpu.memory_space<smem>>
    %c91 = arith.constant 91 : index
    %91 = memref.load %arg1[%c91] : memref<98xf32, #tpu.memory_space<smem>>
    %c92 = arith.constant 92 : index
    %92 = memref.load %arg1[%c92] : memref<98xf32, #tpu.memory_space<smem>>
    %c93 = arith.constant 93 : index
    %93 = memref.load %arg1[%c93] : memref<98xf32, #tpu.memory_space<smem>>
    %c94 = arith.constant 94 : index
    %94 = memref.load %arg1[%c94] : memref<98xf32, #tpu.memory_space<smem>>
    %c95 = arith.constant 95 : index
    %95 = memref.load %arg1[%c95] : memref<98xf32, #tpu.memory_space<smem>>
    %c96 = arith.constant 96 : index
    %96 = memref.load %arg1[%c96] : memref<98xf32, #tpu.memory_space<smem>>
    %c97 = arith.constant 97 : index
    %97 = memref.load %arg1[%c97] : memref<98xf32, #tpu.memory_space<smem>>
    %c0_0 = arith.constant 0 : index
    %98 = memref.load %arg2[%c0_0] : memref<1xf32, #tpu.memory_space<smem>>
    %cst = arith.constant 0.000000e+00 : f32
    %99 = vector.broadcast %cst : f32 to vector<2x1x51xf32>
    %c0_1 = arith.constant 0 : index
    %c0_2 = arith.constant 0 : index
    %c0_3 = arith.constant 0 : index
    %100 = vector.load %arg5[%c0_1, %c0_2, %c0_3] : memref<2x1x384xf32, #tpu.memory_space<vmem>>, vector<2x1x51xf32>
    tpu.vector_store %arg5[%c0_1, %c0_2, %c0_3], %99 {strides = array<i32>} : memref<2x1x384xf32, #tpu.memory_space<vmem>>, vector<2x1x51xf32>,
    %cst_4 = arith.constant 0.000000e+00 : f32
    %101 = vector.broadcast %cst_4 : f32 to vector<2x1x77xf32>
    %c0_5 = arith.constant 0 : index
    %c0_6 = arith.constant 0 : index
    %c307 = arith.constant 307 : index
    %102 = vector.load %arg5[%c0_5, %c0_6, %c307] : memref<2x1x384xf32, #tpu.memory_space<vmem>>, vector<2x1x77xf32>
    tpu.vector_store %arg5[%c0_5, %c0_6, %c307], %101 {strides = array<i32>} : memref<2x1x384xf32, #tpu.memory_space<vmem>>, vector<2x1x77xf32>,
    %c0_7 = arith.constant 0 : index
    %c0_8 = arith.constant 0 : index
    %c0_9 = arith.constant 0 : index
    %103 = vector.load %arg3[%c0_7, %c0_8, %c0_9] : memref<1x4x256xf32, #tpu.memory_space<vmem>>, vector<1x4x256xf32>
    %cst_10 = arith.constant dense<0xFF800000> : vector<1x256xf32>
    %104 = vector.multi_reduction <maximumf>, %103, %cst_10 [1] : vector<1x4x256xf32> to vector<1x256xf32>
    %cst_11 = arith.constant dense<0.000000e+00> : vector<1x256xf32>
    %105 = vector.multi_reduction <add>, %103, %cst_11 [1] : vector<1x4x256xf32> to vector<1x256xf32>
    %cst_12 = arith.constant 2.500000e-01 : f32
    %106 = vector.broadcast %cst_12 : f32 to vector<1x256xf32>
    %107 = arith.mulf %105, %106 : vector<1x256xf32>
    %c0_13 = arith.constant 0 : index
    %c0_14 = arith.constant 0 : index
    %c51_15 = arith.constant 51 : index
    %108 = vector.load %arg5[%c0_13, %c0_14, %c51_15] : memref<2x1x384xf32, #tpu.memory_space<vmem>>, vector<1x1x256xf32>
    %109 = vector.shape_cast %108 : vector<1x1x256xf32> to vector<1x256xf32>
    %110 = vector.shape_cast %104 : vector<1x256xf32> to vector<1x1x256xf32>
    tpu.vector_store %arg5[%c0_13, %c0_14, %c51_15], %110 {strides = array<i32>} : memref<2x1x384xf32, #tpu.memory_space<vmem>>, vector<1x1x256xf32>,
    %c1_16 = arith.constant 1 : index
    %c0_17 = arith.constant 0 : index
    %c51_18 = arith.constant 51 : index
    %111 = vector.load %arg5[%c1_16, %c0_17, %c51_18] : memref<2x1x384xf32, #tpu.memory_space<vmem>>, vector<1x1x256xf32>
    %112 = vector.shape_cast %111 : vector<1x1x256xf32> to vector<1x256xf32>
    %113 = vector.shape_cast %107 : vector<1x256xf32> to vector<1x1x256xf32>
    tpu.vector_store %arg5[%c1_16, %c0_17, %c51_18], %113 {strides = array<i32>} : memref<2x1x384xf32, #tpu.memory_space<vmem>>, vector<1x1x256xf32>,
    %114 = tpu.iota {dimensions = array<i32: 1>} : vector<1x256xi32>
    %c16_i32 = arith.constant 16 : i32
    %c0_i32 = arith.constant 0 : i32
    %115 = arith.cmpi eq, %c16_i32, %c0_i32 : i32
    %c1_i32 = arith.constant 1 : i32
    %116 = arith.select %115, %c1_i32, %c16_i32 : i32
    %117 = vector.broadcast %116 : i32 to vector<1x256xi32>
    %118 = arith.remsi %114, %117 : vector<1x256xi32>
    %c0_i32_19 = arith.constant 0 : i32
    %119 = vector.broadcast %c0_i32_19 : i32 to vector<1x256xi32>
    %120 = arith.cmpi ne, %118, %119 : vector<1x256xi32>
    %c0_i32_20 = arith.constant 0 : i32
    %121 = vector.broadcast %c0_i32_20 : i32 to vector<1x256xi32>
    %122 = arith.cmpi slt, %118, %121 : vector<1x256xi32>
    %c0_i32_21 = arith.constant 0 : i32
    %123 = arith.cmpi slt, %116, %c0_i32_21 : i32
    %124 = vector.broadcast %123 : i1 to vector<1x256xi1>
    %125 = vector.broadcast %124 : vector<1x256xi1> to vector<1x256xi1>
    %126 = arith.xori %122, %125 : vector<1x256xi1>
    %127 = arith.andi %126, %120 : vector<1x256xi1>
    %128 = vector.broadcast %116 : i32 to vector<1x256xi32>
    %129 = arith.addi %118, %128 : vector<1x256xi32>
    %130 = arith.select %127, %129, %118 : vector<1x256xi1>, vector<1x256xi32>
    %131 = vector.broadcast %98 : f32 to vector<1x256xf32>
    %c0_22 = arith.constant 0 : index
    %c0_23 = arith.constant 0 : index
    %c0_24 = arith.constant 0 : index
    %132 = vector.load %arg5[%c0_22, %c0_23, %c0_24] : memref<2x1x384xf32, #tpu.memory_space<vmem>>, vector<1x1x256xf32>
    %133 = vector.shape_cast %132 : vector<1x1x256xf32> to vector<1x256xf32>
    %134 = vector.broadcast %0 : f32 to vector<1x256xf32>
    %135 = arith.mulf %134, %133 : vector<1x256xf32>
    %c0_25 = arith.constant 0 : index
    %c0_26 = arith.constant 0 : index
    %c16_27 = arith.constant 16 : index
    %136 = vector.load %arg5[%c0_25, %c0_26, %c16_27] : memref<2x1x384xf32, #tpu.memory_space<vmem>>, vector<1x1x256xf32>
    %137 = vector.shape_cast %136 : vector<1x1x256xf32> to vector<1x256xf32>
    %138 = vector.broadcast %7 : f32 to vector<1x256xf32>
    %139 = arith.mulf %138, %137 : vector<1x256xf32>
    %140 = arith.addf %135, %139 : vector<1x256xf32>
    %c0_28 = arith.constant 0 : index
    %c0_29 = arith.constant 0 : index
    %c32_30 = arith.constant 32 : index
    %141 = vector.load %arg5[%c0_28, %c0_29, %c32_30] : memref<2x1x384xf32, #tpu.memory_space<vmem>>, vector<1x1x256xf32>
    %142 = vector.shape_cast %141 : vector<1x1x256xf32> to vector<1x256xf32>
    %143 = vector.broadcast %14 : f32 to vector<1x256xf32>
    %144 = arith.mulf %143, %142 : vector<1x256xf32>
    %145 = arith.addf %140, %144 : vector<1x256xf32>
    %c0_31 = arith.constant 0 : index
    %c0_32 = arith.constant 0 : index
    %c48_33 = arith.constant 48 : index
    %146 = vector.load %arg5[%c0_31, %c0_32, %c48_33] : memref<2x1x384xf32, #tpu.memory_space<vmem>>, vector<1x1x256xf32>
    %147 = vector.shape_cast %146 : vector<1x1x256xf32> to vector<1x256xf32>
    %148 = vector.broadcast %21 : f32 to vector<1x256xf32>
    %149 = arith.mulf %148, %147 : vector<1x256xf32>
    %150 = arith.addf %145, %149 : vector<1x256xf32>
    %c0_34 = arith.constant 0 : index
    %c0_35 = arith.constant 0 : index
    %c64_36 = arith.constant 64 : index
    %151 = vector.load %arg5[%c0_34, %c0_35, %c64_36] : memref<2x1x384xf32, #tpu.memory_space<vmem>>, vector<1x1x256xf32>
    %152 = vector.shape_cast %151 : vector<1x1x256xf32> to vector<1x256xf32>
    %153 = vector.broadcast %28 : f32 to vector<1x256xf32>
    %154 = arith.mulf %153, %152 : vector<1x256xf32>
    %155 = arith.addf %150, %154 : vector<1x256xf32>
    %c0_37 = arith.constant 0 : index
    %c0_38 = arith.constant 0 : index
    %c80_39 = arith.constant 80 : index
    %156 = vector.load %arg5[%c0_37, %c0_38, %c80_39] : memref<2x1x384xf32, #tpu.memory_space<vmem>>, vector<1x1x256xf32>
    %157 = vector.shape_cast %156 : vector<1x1x256xf32> to vector<1x256xf32>
    %158 = vector.broadcast %35 : f32 to vector<1x256xf32>
    %159 = arith.mulf %158, %157 : vector<1x256xf32>
    %160 = arith.addf %155, %159 : vector<1x256xf32>
    %c0_40 = arith.constant 0 : index
    %c0_41 = arith.constant 0 : index
    %c96_42 = arith.constant 96 : index
    %161 = vector.load %arg5[%c0_40, %c0_41, %c96_42] : memref<2x1x384xf32, #tpu.memory_space<vmem>>, vector<1x1x256xf32>
    %162 = vector.shape_cast %161 : vector<1x1x256xf32> to vector<1x256xf32>
    %163 = vector.broadcast %42 : f32 to vector<1x256xf32>
    %164 = arith.mulf %163, %162 : vector<1x256xf32>
    %165 = arith.addf %160, %164 : vector<1x256xf32>
    %c3_i32 = arith.constant 3 : i32
    %166 = vector.broadcast %c3_i32 : i32 to vector<1x256xi32>
    %167 = arith.cmpi sge, %130, %166 : vector<1x256xi32>
    %c19_i32 = arith.constant 19 : i32
    %168 = vector.broadcast %c19_i32 : i32 to vector<1x256xi32>
    %169 = arith.cmpi slt, %130, %168 : vector<1x256xi32>
    %170 = arith.andi %167, %169 : vector<1x256xi1>
    %cst_43 = arith.constant 0.000000e+00 : f32
    %171 = vector.broadcast %cst_43 : f32 to vector<1x256xf32>
    %172 = arith.select %170, %165, %171 : vector<1x256xi1>, vector<1x256xf32>
    %173 = arith.addf %131, %172 : vector<1x256xf32>
    %c0_44 = arith.constant 0 : index
    %c0_45 = arith.constant 0 : index
    %c1_46 = arith.constant 1 : index
    %174 = vector.load %arg5[%c0_44, %c0_45, %c1_46] : memref<2x1x384xf32, #tpu.memory_space<vmem>>, vector<1x1x256xf32>
    %175 = vector.shape_cast %174 : vector<1x1x256xf32> to vector<1x256xf32>
    %176 = vector.broadcast %1 : f32 to vector<1x256xf32>
    %177 = arith.mulf %176, %175 : vector<1x256xf32>
    %c0_47 = arith.constant 0 : index
    %c0_48 = arith.constant 0 : index
    %c17_49 = arith.constant 17 : index
    %178 = vector.load %arg5[%c0_47, %c0_48, %c17_49] : memref<2x1x384xf32, #tpu.memory_space<vmem>>, vector<1x1x256xf32>
    %179 = vector.shape_cast %178 : vector<1x1x256xf32> to vector<1x256xf32>
    %180 = vector.broadcast %8 : f32 to vector<1x256xf32>
    %181 = arith.mulf %180, %179 : vector<1x256xf32>
    %182 = arith.addf %177, %181 : vector<1x256xf32>
    %c0_50 = arith.constant 0 : index
    %c0_51 = arith.constant 0 : index
    %c33_52 = arith.constant 33 : index
    %183 = vector.load %arg5[%c0_50, %c0_51, %c33_52] : memref<2x1x384xf32, #tpu.memory_space<vmem>>, vector<1x1x256xf32>
    %184 = vector.shape_cast %183 : vector<1x1x256xf32> to vector<1x256xf32>
    %185 = vector.broadcast %15 : f32 to vector<1x256xf32>
    %186 = arith.mulf %185, %184 : vector<1x256xf32>
    %187 = arith.addf %182, %186 : vector<1x256xf32>
    %c0_53 = arith.constant 0 : index
    %c0_54 = arith.constant 0 : index
    %c49_55 = arith.constant 49 : index
    %188 = vector.load %arg5[%c0_53, %c0_54, %c49_55] : memref<2x1x384xf32, #tpu.memory_space<vmem>>, vector<1x1x256xf32>
    %189 = vector.shape_cast %188 : vector<1x1x256xf32> to vector<1x256xf32>
    %190 = vector.broadcast %22 : f32 to vector<1x256xf32>
    %191 = arith.mulf %190, %189 : vector<1x256xf32>
    %192 = arith.addf %187, %191 : vector<1x256xf32>
    %c0_56 = arith.constant 0 : index
    %c0_57 = arith.constant 0 : index
    %c65_58 = arith.constant 65 : index
    %193 = vector.load %arg5[%c0_56, %c0_57, %c65_58] : memref<2x1x384xf32, #tpu.memory_space<vmem>>, vector<1x1x256xf32>
    %194 = vector.shape_cast %193 : vector<1x1x256xf32> to vector<1x256xf32>
    %195 = vector.broadcast %29 : f32 to vector<1x256xf32>
    %196 = arith.mulf %195, %194 : vector<1x256xf32>
    %197 = arith.addf %192, %196 : vector<1x256xf32>
    %c0_59 = arith.constant 0 : index
    %c0_60 = arith.constant 0 : index
    %c81_61 = arith.constant 81 : index
    %198 = vector.load %arg5[%c0_59, %c0_60, %c81_61] : memref<2x1x384xf32, #tpu.memory_space<vmem>>, vector<1x1x256xf32>
    %199 = vector.shape_cast %198 : vector<1x1x256xf32> to vector<1x256xf32>
    %200 = vector.broadcast %36 : f32 to vector<1x256xf32>
    %201 = arith.mulf %200, %199 : vector<1x256xf32>
    %202 = arith.addf %197, %201 : vector<1x256xf32>
    %c0_62 = arith.constant 0 : index
    %c0_63 = arith.constant 0 : index
    %c97_64 = arith.constant 97 : index
    %203 = vector.load %arg5[%c0_62, %c0_63, %c97_64] : memref<2x1x384xf32, #tpu.memory_space<vmem>>, vector<1x1x256xf32>
    %204 = vector.shape_cast %203 : vector<1x1x256xf32> to vector<1x256xf32>
    %205 = vector.broadcast %43 : f32 to vector<1x256xf32>
    %206 = arith.mulf %205, %204 : vector<1x256xf32>
    %207 = arith.addf %202, %206 : vector<1x256xf32>
    %c2_i32 = arith.constant 2 : i32
    %208 = vector.broadcast %c2_i32 : i32 to vector<1x256xi32>
    %209 = arith.cmpi sge, %130, %208 : vector<1x256xi32>
    %c18_i32 = arith.constant 18 : i32
    %210 = vector.broadcast %c18_i32 : i32 to vector<1x256xi32>
    %211 = arith.cmpi slt, %130, %210 : vector<1x256xi32>
    %212 = arith.andi %209, %211 : vector<1x256xi1>
    %cst_65 = arith.constant 0.000000e+00 : f32
    %213 = vector.broadcast %cst_65 : f32 to vector<1x256xf32>
    %214 = arith.select %212, %207, %213 : vector<1x256xi1>, vector<1x256xf32>
    %215 = arith.addf %173, %214 : vector<1x256xf32>
    %c0_66 = arith.constant 0 : index
    %c0_67 = arith.constant 0 : index
    %c2_68 = arith.constant 2 : index
    %216 = vector.load %arg5[%c0_66, %c0_67, %c2_68] : memref<2x1x384xf32, #tpu.memory_space<vmem>>, vector<1x1x256xf32>
    %217 = vector.shape_cast %216 : vector<1x1x256xf32> to vector<1x256xf32>
    %218 = vector.broadcast %2 : f32 to vector<1x256xf32>
    %219 = arith.mulf %218, %217 : vector<1x256xf32>
    %c0_69 = arith.constant 0 : index
    %c0_70 = arith.constant 0 : index
    %c18_71 = arith.constant 18 : index
    %220 = vector.load %arg5[%c0_69, %c0_70, %c18_71] : memref<2x1x384xf32, #tpu.memory_space<vmem>>, vector<1x1x256xf32>
    %221 = vector.shape_cast %220 : vector<1x1x256xf32> to vector<1x256xf32>
    %222 = vector.broadcast %9 : f32 to vector<1x256xf32>
    %223 = arith.mulf %222, %221 : vector<1x256xf32>
    %224 = arith.addf %219, %223 : vector<1x256xf32>
    %c0_72 = arith.constant 0 : index
    %c0_73 = arith.constant 0 : index
    %c34_74 = arith.constant 34 : index
    %225 = vector.load %arg5[%c0_72, %c0_73, %c34_74] : memref<2x1x384xf32, #tpu.memory_space<vmem>>, vector<1x1x256xf32>
    %226 = vector.shape_cast %225 : vector<1x1x256xf32> to vector<1x256xf32>
    %227 = vector.broadcast %16 : f32 to vector<1x256xf32>
    %228 = arith.mulf %227, %226 : vector<1x256xf32>
    %229 = arith.addf %224, %228 : vector<1x256xf32>
    %c0_75 = arith.constant 0 : index
    %c0_76 = arith.constant 0 : index
    %c50_77 = arith.constant 50 : index
    %230 = vector.load %arg5[%c0_75, %c0_76, %c50_77] : memref<2x1x384xf32, #tpu.memory_space<vmem>>, vector<1x1x256xf32>
    %231 = vector.shape_cast %230 : vector<1x1x256xf32> to vector<1x256xf32>
    %232 = vector.broadcast %23 : f32 to vector<1x256xf32>
    %233 = arith.mulf %232, %231 : vector<1x256xf32>
    %234 = arith.addf %229, %233 : vector<1x256xf32>
    %c0_78 = arith.constant 0 : index
    %c0_79 = arith.constant 0 : index
    %c66_80 = arith.constant 66 : index
    %235 = vector.load %arg5[%c0_78, %c0_79, %c66_80] : memref<2x1x384xf32, #tpu.memory_space<vmem>>, vector<1x1x256xf32>
    %236 = vector.shape_cast %235 : vector<1x1x256xf32> to vector<1x256xf32>
    %237 = vector.broadcast %30 : f32 to vector<1x256xf32>
    %238 = arith.mulf %237, %236 : vector<1x256xf32>
    %239 = arith.addf %234, %238 : vector<1x256xf32>
    %c0_81 = arith.constant 0 : index
    %c0_82 = arith.constant 0 : index
    %c82_83 = arith.constant 82 : index
    %240 = vector.load %arg5[%c0_81, %c0_82, %c82_83] : memref<2x1x384xf32, #tpu.memory_space<vmem>>, vector<1x1x256xf32>
    %241 = vector.shape_cast %240 : vector<1x1x256xf32> to vector<1x256xf32>
    %242 = vector.broadcast %37 : f32 to vector<1x256xf32>
    %243 = arith.mulf %242, %241 : vector<1x256xf32>
    %244 = arith.addf %239, %243 : vector<1x256xf32>
    %c0_84 = arith.constant 0 : index
    %c0_85 = arith.constant 0 : index
    %c98 = arith.constant 98 : index
    %245 = vector.load %arg5[%c0_84, %c0_85, %c98] : memref<2x1x384xf32, #tpu.memory_space<vmem>>, vector<1x1x256xf32>
    %246 = vector.shape_cast %245 : vector<1x1x256xf32> to vector<1x256xf32>
    %247 = vector.broadcast %44 : f32 to vector<1x256xf32>
    %248 = arith.mulf %247, %246 : vector<1x256xf32>
    %249 = arith.addf %244, %248 : vector<1x256xf32>
    %c1_i32_86 = arith.constant 1 : i32
    %250 = vector.broadcast %c1_i32_86 : i32 to vector<1x256xi32>
    %251 = arith.cmpi sge, %130, %250 : vector<1x256xi32>
    %c17_i32 = arith.constant 17 : i32
    %252 = vector.broadcast %c17_i32 : i32 to vector<1x256xi32>
    %253 = arith.cmpi slt, %130, %252 : vector<1x256xi32>
    %254 = arith.andi %251, %253 : vector<1x256xi1>
    %cst_87 = arith.constant 0.000000e+00 : f32
    %255 = vector.broadcast %cst_87 : f32 to vector<1x256xf32>
    %256 = arith.select %254, %249, %255 : vector<1x256xi1>, vector<1x256xf32>
    %257 = arith.addf %215, %256 : vector<1x256xf32>
    %c0_88 = arith.constant 0 : index
    %c0_89 = arith.constant 0 : index
    %c3_90 = arith.constant 3 : index
    %258 = vector.load %arg5[%c0_88, %c0_89, %c3_90] : memref<2x1x384xf32, #tpu.memory_space<vmem>>, vector<1x1x256xf32>
    %259 = vector.shape_cast %258 : vector<1x1x256xf32> to vector<1x256xf32>
    %260 = vector.broadcast %3 : f32 to vector<1x256xf32>
    %261 = arith.mulf %260, %259 : vector<1x256xf32>
    %c0_91 = arith.constant 0 : index
    %c0_92 = arith.constant 0 : index
    %c19_93 = arith.constant 19 : index
    %262 = vector.load %arg5[%c0_91, %c0_92, %c19_93] : memref<2x1x384xf32, #tpu.memory_space<vmem>>, vector<1x1x256xf32>
    %263 = vector.shape_cast %262 : vector<1x1x256xf32> to vector<1x256xf32>
    %264 = vector.broadcast %10 : f32 to vector<1x256xf32>
    %265 = arith.mulf %264, %263 : vector<1x256xf32>
    %266 = arith.addf %261, %265 : vector<1x256xf32>
    %c0_94 = arith.constant 0 : index
    %c0_95 = arith.constant 0 : index
    %c35_96 = arith.constant 35 : index
    %267 = vector.load %arg5[%c0_94, %c0_95, %c35_96] : memref<2x1x384xf32, #tpu.memory_space<vmem>>, vector<1x1x256xf32>
    %268 = vector.shape_cast %267 : vector<1x1x256xf32> to vector<1x256xf32>
    %269 = vector.broadcast %17 : f32 to vector<1x256xf32>
    %270 = arith.mulf %269, %268 : vector<1x256xf32>
    %271 = arith.addf %266, %270 : vector<1x256xf32>
    %c0_97 = arith.constant 0 : index
    %c0_98 = arith.constant 0 : index
    %c51_99 = arith.constant 51 : index
    %272 = vector.load %arg5[%c0_97, %c0_98, %c51_99] : memref<2x1x384xf32, #tpu.memory_space<vmem>>, vector<1x1x256xf32>
    %273 = vector.shape_cast %272 : vector<1x1x256xf32> to vector<1x256xf32>
    %274 = vector.broadcast %24 : f32 to vector<1x256xf32>
    %275 = arith.mulf %274, %273 : vector<1x256xf32>
    %276 = arith.addf %271, %275 : vector<1x256xf32>
    %c0_100 = arith.constant 0 : index
    %c0_101 = arith.constant 0 : index
    %c67_102 = arith.constant 67 : index
    %277 = vector.load %arg5[%c0_100, %c0_101, %c67_102] : memref<2x1x384xf32, #tpu.memory_space<vmem>>, vector<1x1x256xf32>
    %278 = vector.shape_cast %277 : vector<1x1x256xf32> to vector<1x256xf32>
    %279 = vector.broadcast %31 : f32 to vector<1x256xf32>
    %280 = arith.mulf %279, %278 : vector<1x256xf32>
    %281 = arith.addf %276, %280 : vector<1x256xf32>
    %c0_103 = arith.constant 0 : index
    %c0_104 = arith.constant 0 : index
    %c83_105 = arith.constant 83 : index
    %282 = vector.load %arg5[%c0_103, %c0_104, %c83_105] : memref<2x1x384xf32, #tpu.memory_space<vmem>>, vector<1x1x256xf32>
    %283 = vector.shape_cast %282 : vector<1x1x256xf32> to vector<1x256xf32>
    %284 = vector.broadcast %38 : f32 to vector<1x256xf32>
    %285 = arith.mulf %284, %283 : vector<1x256xf32>
    %286 = arith.addf %281, %285 : vector<1x256xf32>
    %c0_106 = arith.constant 0 : index
    %c0_107 = arith.constant 0 : index
    %c99 = arith.constant 99 : index
    %287 = vector.load %arg5[%c0_106, %c0_107, %c99] : memref<2x1x384xf32, #tpu.memory_space<vmem>>, vector<1x1x256xf32>
    %288 = vector.shape_cast %287 : vector<1x1x256xf32> to vector<1x256xf32>
    %289 = vector.broadcast %45 : f32 to vector<1x256xf32>
    %290 = arith.mulf %289, %288 : vector<1x256xf32>
    %291 = arith.addf %286, %290 : vector<1x256xf32>
    %292 = arith.addf %257, %291 : vector<1x256xf32>
    %c0_108 = arith.constant 0 : index
    %c0_109 = arith.constant 0 : index
    %c4_110 = arith.constant 4 : index
    %293 = vector.load %arg5[%c0_108, %c0_109, %c4_110] : memref<2x1x384xf32, #tpu.memory_space<vmem>>, vector<1x1x256xf32>
    %294 = vector.shape_cast %293 : vector<1x1x256xf32> to vector<1x256xf32>
    %295 = vector.broadcast %4 : f32 to vector<1x256xf32>
    %296 = arith.mulf %295, %294 : vector<1x256xf32>
    %c0_111 = arith.constant 0 : index
    %c0_112 = arith.constant 0 : index
    %c20_113 = arith.constant 20 : index
    %297 = vector.load %arg5[%c0_111, %c0_112, %c20_113] : memref<2x1x384xf32, #tpu.memory_space<vmem>>, vector<1x1x256xf32>
    %298 = vector.shape_cast %297 : vector<1x1x256xf32> to vector<1x256xf32>
    %299 = vector.broadcast %11 : f32 to vector<1x256xf32>
    %300 = arith.mulf %299, %298 : vector<1x256xf32>
    %301 = arith.addf %296, %300 : vector<1x256xf32>
    %c0_114 = arith.constant 0 : index
    %c0_115 = arith.constant 0 : index
    %c36_116 = arith.constant 36 : index
    %302 = vector.load %arg5[%c0_114, %c0_115, %c36_116] : memref<2x1x384xf32, #tpu.memory_space<vmem>>, vector<1x1x256xf32>
    %303 = vector.shape_cast %302 : vector<1x1x256xf32> to vector<1x256xf32>
    %304 = vector.broadcast %18 : f32 to vector<1x256xf32>
    %305 = arith.mulf %304, %303 : vector<1x256xf32>
    %306 = arith.addf %301, %305 : vector<1x256xf32>
    %c0_117 = arith.constant 0 : index
    %c0_118 = arith.constant 0 : index
    %c52_119 = arith.constant 52 : index
    %307 = vector.load %arg5[%c0_117, %c0_118, %c52_119] : memref<2x1x384xf32, #tpu.memory_space<vmem>>, vector<1x1x256xf32>
    %308 = vector.shape_cast %307 : vector<1x1x256xf32> to vector<1x256xf32>
    %309 = vector.broadcast %25 : f32 to vector<1x256xf32>
    %310 = arith.mulf %309, %308 : vector<1x256xf32>
    %311 = arith.addf %306, %310 : vector<1x256xf32>
    %c0_120 = arith.constant 0 : index
    %c0_121 = arith.constant 0 : index
    %c68_122 = arith.constant 68 : index
    %312 = vector.load %arg5[%c0_120, %c0_121, %c68_122] : memref<2x1x384xf32, #tpu.memory_space<vmem>>, vector<1x1x256xf32>
    %313 = vector.shape_cast %312 : vector<1x1x256xf32> to vector<1x256xf32>
    %314 = vector.broadcast %32 : f32 to vector<1x256xf32>
    %315 = arith.mulf %314, %313 : vector<1x256xf32>
    %316 = arith.addf %311, %315 : vector<1x256xf32>
    %c0_123 = arith.constant 0 : index
    %c0_124 = arith.constant 0 : index
    %c84_125 = arith.constant 84 : index
    %317 = vector.load %arg5[%c0_123, %c0_124, %c84_125] : memref<2x1x384xf32, #tpu.memory_space<vmem>>, vector<1x1x256xf32>
    %318 = vector.shape_cast %317 : vector<1x1x256xf32> to vector<1x256xf32>
    %319 = vector.broadcast %39 : f32 to vector<1x256xf32>
    %320 = arith.mulf %319, %318 : vector<1x256xf32>
    %321 = arith.addf %316, %320 : vector<1x256xf32>
    %c0_126 = arith.constant 0 : index
    %c0_127 = arith.constant 0 : index
    %c100 = arith.constant 100 : index
    %322 = vector.load %arg5[%c0_126, %c0_127, %c100] : memref<2x1x384xf32, #tpu.memory_space<vmem>>, vector<1x1x256xf32>
    %323 = vector.shape_cast %322 : vector<1x1x256xf32> to vector<1x256xf32>
    %324 = vector.broadcast %46 : f32 to vector<1x256xf32>
    %325 = arith.mulf %324, %323 : vector<1x256xf32>
    %326 = arith.addf %321, %325 : vector<1x256xf32>
    %c-1_i32 = arith.constant -1 : i32
    %327 = vector.broadcast %c-1_i32 : i32 to vector<1x256xi32>
    %328 = arith.cmpi sge, %130, %327 : vector<1x256xi32>
    %c15_i32 = arith.constant 15 : i32
    %329 = vector.broadcast %c15_i32 : i32 to vector<1x256xi32>
    %330 = arith.cmpi slt, %130, %329 : vector<1x256xi32>
    %331 = arith.andi %328, %330 : vector<1x256xi1>
    %cst_128 = arith.constant 0.000000e+00 : f32
    %332 = vector.broadcast %cst_128 : f32 to vector<1x256xf32>
    %333 = arith.select %331, %326, %332 : vector<1x256xi1>, vector<1x256xf32>
    %334 = arith.addf %292, %333 : vector<1x256xf32>
    %c0_129 = arith.constant 0 : index
    %c0_130 = arith.constant 0 : index
    %c5_131 = arith.constant 5 : index
    %335 = vector.load %arg5[%c0_129, %c0_130, %c5_131] : memref<2x1x384xf32, #tpu.memory_space<vmem>>, vector<1x1x256xf32>
    %336 = vector.shape_cast %335 : vector<1x1x256xf32> to vector<1x256xf32>
    %337 = vector.broadcast %5 : f32 to vector<1x256xf32>
    %338 = arith.mulf %337, %336 : vector<1x256xf32>
    %c0_132 = arith.constant 0 : index
    %c0_133 = arith.constant 0 : index
    %c21_134 = arith.constant 21 : index
    %339 = vector.load %arg5[%c0_132, %c0_133, %c21_134] : memref<2x1x384xf32, #tpu.memory_space<vmem>>, vector<1x1x256xf32>
    %340 = vector.shape_cast %339 : vector<1x1x256xf32> to vector<1x256xf32>
    %341 = vector.broadcast %12 : f32 to vector<1x256xf32>
    %342 = arith.mulf %341, %340 : vector<1x256xf32>
    %343 = arith.addf %338, %342 : vector<1x256xf32>
    %c0_135 = arith.constant 0 : index
    %c0_136 = arith.constant 0 : index
    %c37_137 = arith.constant 37 : index
    %344 = vector.load %arg5[%c0_135, %c0_136, %c37_137] : memref<2x1x384xf32, #tpu.memory_space<vmem>>, vector<1x1x256xf32>
    %345 = vector.shape_cast %344 : vector<1x1x256xf32> to vector<1x256xf32>
    %346 = vector.broadcast %19 : f32 to vector<1x256xf32>
    %347 = arith.mulf %346, %345 : vector<1x256xf32>
    %348 = arith.addf %343, %347 : vector<1x256xf32>
    %c0_138 = arith.constant 0 : index
    %c0_139 = arith.constant 0 : index
    %c53_140 = arith.constant 53 : index
    %349 = vector.load %arg5[%c0_138, %c0_139, %c53_140] : memref<2x1x384xf32, #tpu.memory_space<vmem>>, vector<1x1x256xf32>
    %350 = vector.shape_cast %349 : vector<1x1x256xf32> to vector<1x256xf32>
    %351 = vector.broadcast %26 : f32 to vector<1x256xf32>
    %352 = arith.mulf %351, %350 : vector<1x256xf32>
    %353 = arith.addf %348, %352 : vector<1x256xf32>
    %c0_141 = arith.constant 0 : index
    %c0_142 = arith.constant 0 : index
    %c69_143 = arith.constant 69 : index
    %354 = vector.load %arg5[%c0_141, %c0_142, %c69_143] : memref<2x1x384xf32, #tpu.memory_space<vmem>>, vector<1x1x256xf32>
    %355 = vector.shape_cast %354 : vector<1x1x256xf32> to vector<1x256xf32>
    %356 = vector.broadcast %33 : f32 to vector<1x256xf32>
    %357 = arith.mulf %356, %355 : vector<1x256xf32>
    %358 = arith.addf %353, %357 : vector<1x256xf32>
    %c0_144 = arith.constant 0 : index
    %c0_145 = arith.constant 0 : index
    %c85_146 = arith.constant 85 : index
    %359 = vector.load %arg5[%c0_144, %c0_145, %c85_146] : memref<2x1x384xf32, #tpu.memory_space<vmem>>, vector<1x1x256xf32>
    %360 = vector.shape_cast %359 : vector<1x1x256xf32> to vector<1x256xf32>
    %361 = vector.broadcast %40 : f32 to vector<1x256xf32>
    %362 = arith.mulf %361, %360 : vector<1x256xf32>
    %363 = arith.addf %358, %362 : vector<1x256xf32>
    %c0_147 = arith.constant 0 : index
    %c0_148 = arith.constant 0 : index
    %c101 = arith.constant 101 : index
    %364 = vector.load %arg5[%c0_147, %c0_148, %c101] : memref<2x1x384xf32, #tpu.memory_space<vmem>>, vector<1x1x256xf32>
    %365 = vector.shape_cast %364 : vector<1x1x256xf32> to vector<1x256xf32>
    %366 = vector.broadcast %47 : f32 to vector<1x256xf32>
    %367 = arith.mulf %366, %365 : vector<1x256xf32>
    %368 = arith.addf %363, %367 : vector<1x256xf32>
    %c-2_i32 = arith.constant -2 : i32
    %369 = vector.broadcast %c-2_i32 : i32 to vector<1x256xi32>
    %370 = arith.cmpi sge, %130, %369 : vector<1x256xi32>
    %c14_i32 = arith.constant 14 : i32
    %371 = vector.broadcast %c14_i32 : i32 to vector<1x256xi32>
    %372 = arith.cmpi slt, %130, %371 : vector<1x256xi32>
    %373 = arith.andi %370, %372 : vector<1x256xi1>
    %cst_149 = arith.constant 0.000000e+00 : f32
    %374 = vector.broadcast %cst_149 : f32 to vector<1x256xf32>
    %375 = arith.select %373, %368, %374 : vector<1x256xi1>, vector<1x256xf32>
    %376 = arith.addf %334, %375 : vector<1x256xf32>
    %c0_150 = arith.constant 0 : index
    %c0_151 = arith.constant 0 : index
    %c6_152 = arith.constant 6 : index
    %377 = vector.load %arg5[%c0_150, %c0_151, %c6_152] : memref<2x1x384xf32, #tpu.memory_space<vmem>>, vector<1x1x256xf32>
    %378 = vector.shape_cast %377 : vector<1x1x256xf32> to vector<1x256xf32>
    %379 = vector.broadcast %6 : f32 to vector<1x256xf32>
    %380 = arith.mulf %379, %378 : vector<1x256xf32>
    %c0_153 = arith.constant 0 : index
    %c0_154 = arith.constant 0 : index
    %c22_155 = arith.constant 22 : index
    %381 = vector.load %arg5[%c0_153, %c0_154, %c22_155] : memref<2x1x384xf32, #tpu.memory_space<vmem>>, vector<1x1x256xf32>
    %382 = vector.shape_cast %381 : vector<1x1x256xf32> to vector<1x256xf32>
    %383 = vector.broadcast %13 : f32 to vector<1x256xf32>
    %384 = arith.mulf %383, %382 : vector<1x256xf32>
    %385 = arith.addf %380, %384 : vector<1x256xf32>
    %c0_156 = arith.constant 0 : index
    %c0_157 = arith.constant 0 : index
    %c38_158 = arith.constant 38 : index
    %386 = vector.load %arg5[%c0_156, %c0_157, %c38_158] : memref<2x1x384xf32, #tpu.memory_space<vmem>>, vector<1x1x256xf32>
    %387 = vector.shape_cast %386 : vector<1x1x256xf32> to vector<1x256xf32>
    %388 = vector.broadcast %20 : f32 to vector<1x256xf32>
    %389 = arith.mulf %388, %387 : vector<1x256xf32>
    %390 = arith.addf %385, %389 : vector<1x256xf32>
    %c0_159 = arith.constant 0 : index
    %c0_160 = arith.constant 0 : index
    %c54_161 = arith.constant 54 : index
    %391 = vector.load %arg5[%c0_159, %c0_160, %c54_161] : memref<2x1x384xf32, #tpu.memory_space<vmem>>, vector<1x1x256xf32>
    %392 = vector.shape_cast %391 : vector<1x1x256xf32> to vector<1x256xf32>
    %393 = vector.broadcast %27 : f32 to vector<1x256xf32>
    %394 = arith.mulf %393, %392 : vector<1x256xf32>
    %395 = arith.addf %390, %394 : vector<1x256xf32>
    %c0_162 = arith.constant 0 : index
    %c0_163 = arith.constant 0 : index
    %c70_164 = arith.constant 70 : index
    %396 = vector.load %arg5[%c0_162, %c0_163, %c70_164] : memref<2x1x384xf32, #tpu.memory_space<vmem>>, vector<1x1x256xf32>
    %397 = vector.shape_cast %396 : vector<1x1x256xf32> to vector<1x256xf32>
    %398 = vector.broadcast %34 : f32 to vector<1x256xf32>
    %399 = arith.mulf %398, %397 : vector<1x256xf32>
    %400 = arith.addf %395, %399 : vector<1x256xf32>
    %c0_165 = arith.constant 0 : index
    %c0_166 = arith.constant 0 : index
    %c86_167 = arith.constant 86 : index
    %401 = vector.load %arg5[%c0_165, %c0_166, %c86_167] : memref<2x1x384xf32, #tpu.memory_space<vmem>>, vector<1x1x256xf32>
    %402 = vector.shape_cast %401 : vector<1x1x256xf32> to vector<1x256xf32>
    %403 = vector.broadcast %41 : f32 to vector<1x256xf32>
    %404 = arith.mulf %403, %402 : vector<1x256xf32>
    %405 = arith.addf %400, %404 : vector<1x256xf32>
    %c0_168 = arith.constant 0 : index
    %c0_169 = arith.constant 0 : index
    %c102 = arith.constant 102 : index
    %406 = vector.load %arg5[%c0_168, %c0_169, %c102] : memref<2x1x384xf32, #tpu.memory_space<vmem>>, vector<1x1x256xf32>
    %407 = vector.shape_cast %406 : vector<1x1x256xf32> to vector<1x256xf32>
    %408 = vector.broadcast %48 : f32 to vector<1x256xf32>
    %409 = arith.mulf %408, %407 : vector<1x256xf32>
    %410 = arith.addf %405, %409 : vector<1x256xf32>
    %c-3_i32 = arith.constant -3 : i32
    %411 = vector.broadcast %c-3_i32 : i32 to vector<1x256xi32>
    %412 = arith.cmpi sge, %130, %411 : vector<1x256xi32>
    %c13_i32 = arith.constant 13 : i32
    %413 = vector.broadcast %c13_i32 : i32 to vector<1x256xi32>
    %414 = arith.cmpi slt, %130, %413 : vector<1x256xi32>
    %415 = arith.andi %412, %414 : vector<1x256xi1>
    %cst_170 = arith.constant 0.000000e+00 : f32
    %416 = vector.broadcast %cst_170 : f32 to vector<1x256xf32>
    %417 = arith.select %415, %410, %416 : vector<1x256xi1>, vector<1x256xf32>
    %418 = arith.addf %376, %417 : vector<1x256xf32>
    %c1_171 = arith.constant 1 : index
    %c0_172 = arith.constant 0 : index
    %c0_173 = arith.constant 0 : index
    %419 = vector.load %arg5[%c1_171, %c0_172, %c0_173] : memref<2x1x384xf32, #tpu.memory_space<vmem>>, vector<1x1x256xf32>
    %420 = vector.shape_cast %419 : vector<1x1x256xf32> to vector<1x256xf32>
    %421 = vector.broadcast %49 : f32 to vector<1x256xf32>
    %422 = arith.mulf %421, %420 : vector<1x256xf32>
    %c1_174 = arith.constant 1 : index
    %c0_175 = arith.constant 0 : index
    %c16_176 = arith.constant 16 : index
    %423 = vector.load %arg5[%c1_174, %c0_175, %c16_176] : memref<2x1x384xf32, #tpu.memory_space<vmem>>, vector<1x1x256xf32>
    %424 = vector.shape_cast %423 : vector<1x1x256xf32> to vector<1x256xf32>
    %425 = vector.broadcast %56 : f32 to vector<1x256xf32>
    %426 = arith.mulf %425, %424 : vector<1x256xf32>
    %427 = arith.addf %422, %426 : vector<1x256xf32>
    %c1_177 = arith.constant 1 : index
    %c0_178 = arith.constant 0 : index
    %c32_179 = arith.constant 32 : index
    %428 = vector.load %arg5[%c1_177, %c0_178, %c32_179] : memref<2x1x384xf32, #tpu.memory_space<vmem>>, vector<1x1x256xf32>
    %429 = vector.shape_cast %428 : vector<1x1x256xf32> to vector<1x256xf32>
    %430 = vector.broadcast %63 : f32 to vector<1x256xf32>
    %431 = arith.mulf %430, %429 : vector<1x256xf32>
    %432 = arith.addf %427, %431 : vector<1x256xf32>
    %c1_180 = arith.constant 1 : index
    %c0_181 = arith.constant 0 : index
    %c48_182 = arith.constant 48 : index
    %433 = vector.load %arg5[%c1_180, %c0_181, %c48_182] : memref<2x1x384xf32, #tpu.memory_space<vmem>>, vector<1x1x256xf32>
    %434 = vector.shape_cast %433 : vector<1x1x256xf32> to vector<1x256xf32>
    %435 = vector.broadcast %70 : f32 to vector<1x256xf32>
    %436 = arith.mulf %435, %434 : vector<1x256xf32>
    %437 = arith.addf %432, %436 : vector<1x256xf32>
    %c1_183 = arith.constant 1 : index
    %c0_184 = arith.constant 0 : index
    %c64_185 = arith.constant 64 : index
    %438 = vector.load %arg5[%c1_183, %c0_184, %c64_185] : memref<2x1x384xf32, #tpu.memory_space<vmem>>, vector<1x1x256xf32>
    %439 = vector.shape_cast %438 : vector<1x1x256xf32> to vector<1x256xf32>
    %440 = vector.broadcast %77 : f32 to vector<1x256xf32>
    %441 = arith.mulf %440, %439 : vector<1x256xf32>
    %442 = arith.addf %437, %441 : vector<1x256xf32>
    %c1_186 = arith.constant 1 : index
    %c0_187 = arith.constant 0 : index
    %c80_188 = arith.constant 80 : index
    %443 = vector.load %arg5[%c1_186, %c0_187, %c80_188] : memref<2x1x384xf32, #tpu.memory_space<vmem>>, vector<1x1x256xf32>
    %444 = vector.shape_cast %443 : vector<1x1x256xf32> to vector<1x256xf32>
    %445 = vector.broadcast %84 : f32 to vector<1x256xf32>
    %446 = arith.mulf %445, %444 : vector<1x256xf32>
    %447 = arith.addf %442, %446 : vector<1x256xf32>
    %c1_189 = arith.constant 1 : index
    %c0_190 = arith.constant 0 : index
    %c96_191 = arith.constant 96 : index
    %448 = vector.load %arg5[%c1_189, %c0_190, %c96_191] : memref<2x1x384xf32, #tpu.memory_space<vmem>>, vector<1x1x256xf32>
    %449 = vector.shape_cast %448 : vector<1x1x256xf32> to vector<1x256xf32>
    %450 = vector.broadcast %91 : f32 to vector<1x256xf32>
    %451 = arith.mulf %450, %449 : vector<1x256xf32>
    %452 = arith.addf %447, %451 : vector<1x256xf32>
    %c3_i32_192 = arith.constant 3 : i32
    %453 = vector.broadcast %c3_i32_192 : i32 to vector<1x256xi32>
    %454 = arith.cmpi sge, %130, %453 : vector<1x256xi32>
    %c19_i32_193 = arith.constant 19 : i32
    %455 = vector.broadcast %c19_i32_193 : i32 to vector<1x256xi32>
    %456 = arith.cmpi slt, %130, %455 : vector<1x256xi32>
    %457 = arith.andi %454, %456 : vector<1x256xi1>
    %cst_194 = arith.constant 0.000000e+00 : f32
    %458 = vector.broadcast %cst_194 : f32 to vector<1x256xf32>
    %459 = arith.select %457, %452, %458 : vector<1x256xi1>, vector<1x256xf32>
    %460 = arith.addf %418, %459 : vector<1x256xf32>
    %c1_195 = arith.constant 1 : index
    %c0_196 = arith.constant 0 : index
    %c1_197 = arith.constant 1 : index
    %461 = vector.load %arg5[%c1_195, %c0_196, %c1_197] : memref<2x1x384xf32, #tpu.memory_space<vmem>>, vector<1x1x256xf32>
    %462 = vector.shape_cast %461 : vector<1x1x256xf32> to vector<1x256xf32>
    %463 = vector.broadcast %50 : f32 to vector<1x256xf32>
    %464 = arith.mulf %463, %462 : vector<1x256xf32>
    %c1_198 = arith.constant 1 : index
    %c0_199 = arith.constant 0 : index
    %c17_200 = arith.constant 17 : index
    %465 = vector.load %arg5[%c1_198, %c0_199, %c17_200] : memref<2x1x384xf32, #tpu.memory_space<vmem>>, vector<1x1x256xf32>
    %466 = vector.shape_cast %465 : vector<1x1x256xf32> to vector<1x256xf32>
    %467 = vector.broadcast %57 : f32 to vector<1x256xf32>
    %468 = arith.mulf %467, %466 : vector<1x256xf32>
    %469 = arith.addf %464, %468 : vector<1x256xf32>
    %c1_201 = arith.constant 1 : index
    %c0_202 = arith.constant 0 : index
    %c33_203 = arith.constant 33 : index
    %470 = vector.load %arg5[%c1_201, %c0_202, %c33_203] : memref<2x1x384xf32, #tpu.memory_space<vmem>>, vector<1x1x256xf32>
    %471 = vector.shape_cast %470 : vector<1x1x256xf32> to vector<1x256xf32>
    %472 = vector.broadcast %64 : f32 to vector<1x256xf32>
    %473 = arith.mulf %472, %471 : vector<1x256xf32>
    %474 = arith.addf %469, %473 : vector<1x256xf32>
    %c1_204 = arith.constant 1 : index
    %c0_205 = arith.constant 0 : index
    %c49_206 = arith.constant 49 : index
    %475 = vector.load %arg5[%c1_204, %c0_205, %c49_206] : memref<2x1x384xf32, #tpu.memory_space<vmem>>, vector<1x1x256xf32>
    %476 = vector.shape_cast %475 : vector<1x1x256xf32> to vector<1x256xf32>
    %477 = vector.broadcast %71 : f32 to vector<1x256xf32>
    %478 = arith.mulf %477, %476 : vector<1x256xf32>
    %479 = arith.addf %474, %478 : vector<1x256xf32>
    %c1_207 = arith.constant 1 : index
    %c0_208 = arith.constant 0 : index
    %c65_209 = arith.constant 65 : index
    %480 = vector.load %arg5[%c1_207, %c0_208, %c65_209] : memref<2x1x384xf32, #tpu.memory_space<vmem>>, vector<1x1x256xf32>
    %481 = vector.shape_cast %480 : vector<1x1x256xf32> to vector<1x256xf32>
    %482 = vector.broadcast %78 : f32 to vector<1x256xf32>
    %483 = arith.mulf %482, %481 : vector<1x256xf32>
    %484 = arith.addf %479, %483 : vector<1x256xf32>
    %c1_210 = arith.constant 1 : index
    %c0_211 = arith.constant 0 : index
    %c81_212 = arith.constant 81 : index
    %485 = vector.load %arg5[%c1_210, %c0_211, %c81_212] : memref<2x1x384xf32, #tpu.memory_space<vmem>>, vector<1x1x256xf32>
    %486 = vector.shape_cast %485 : vector<1x1x256xf32> to vector<1x256xf32>
    %487 = vector.broadcast %85 : f32 to vector<1x256xf32>
    %488 = arith.mulf %487, %486 : vector<1x256xf32>
    %489 = arith.addf %484, %488 : vector<1x256xf32>
    %c1_213 = arith.constant 1 : index
    %c0_214 = arith.constant 0 : index
    %c97_215 = arith.constant 97 : index
    %490 = vector.load %arg5[%c1_213, %c0_214, %c97_215] : memref<2x1x384xf32, #tpu.memory_space<vmem>>, vector<1x1x256xf32>
    %491 = vector.shape_cast %490 : vector<1x1x256xf32> to vector<1x256xf32>
    %492 = vector.broadcast %92 : f32 to vector<1x256xf32>
    %493 = arith.mulf %492, %491 : vector<1x256xf32>
    %494 = arith.addf %489, %493 : vector<1x256xf32>
    %c2_i32_216 = arith.constant 2 : i32
    %495 = vector.broadcast %c2_i32_216 : i32 to vector<1x256xi32>
    %496 = arith.cmpi sge, %130, %495 : vector<1x256xi32>
    %c18_i32_217 = arith.constant 18 : i32
    %497 = vector.broadcast %c18_i32_217 : i32 to vector<1x256xi32>
    %498 = arith.cmpi slt, %130, %497 : vector<1x256xi32>
    %499 = arith.andi %496, %498 : vector<1x256xi1>
    %cst_218 = arith.constant 0.000000e+00 : f32
    %500 = vector.broadcast %cst_218 : f32 to vector<1x256xf32>
    %501 = arith.select %499, %494, %500 : vector<1x256xi1>, vector<1x256xf32>
    %502 = arith.addf %460, %501 : vector<1x256xf32>
    %c1_219 = arith.constant 1 : index
    %c0_220 = arith.constant 0 : index
    %c2_221 = arith.constant 2 : index
    %503 = vector.load %arg5[%c1_219, %c0_220, %c2_221] : memref<2x1x384xf32, #tpu.memory_space<vmem>>, vector<1x1x256xf32>
    %504 = vector.shape_cast %503 : vector<1x1x256xf32> to vector<1x256xf32>
    %505 = vector.broadcast %51 : f32 to vector<1x256xf32>
    %506 = arith.mulf %505, %504 : vector<1x256xf32>
    %c1_222 = arith.constant 1 : index
    %c0_223 = arith.constant 0 : index
    %c18_224 = arith.constant 18 : index
    %507 = vector.load %arg5[%c1_222, %c0_223, %c18_224] : memref<2x1x384xf32, #tpu.memory_space<vmem>>, vector<1x1x256xf32>
    %508 = vector.shape_cast %507 : vector<1x1x256xf32> to vector<1x256xf32>
    %509 = vector.broadcast %58 : f32 to vector<1x256xf32>
    %510 = arith.mulf %509, %508 : vector<1x256xf32>
    %511 = arith.addf %506, %510 : vector<1x256xf32>
    %c1_225 = arith.constant 1 : index
    %c0_226 = arith.constant 0 : index
    %c34_227 = arith.constant 34 : index
    %512 = vector.load %arg5[%c1_225, %c0_226, %c34_227] : memref<2x1x384xf32, #tpu.memory_space<vmem>>, vector<1x1x256xf32>
    %513 = vector.shape_cast %512 : vector<1x1x256xf32> to vector<1x256xf32>
    %514 = vector.broadcast %65 : f32 to vector<1x256xf32>
    %515 = arith.mulf %514, %513 : vector<1x256xf32>
    %516 = arith.addf %511, %515 : vector<1x256xf32>
    %c1_228 = arith.constant 1 : index
    %c0_229 = arith.constant 0 : index
    %c50_230 = arith.constant 50 : index
    %517 = vector.load %arg5[%c1_228, %c0_229, %c50_230] : memref<2x1x384xf32, #tpu.memory_space<vmem>>, vector<1x1x256xf32>
    %518 = vector.shape_cast %517 : vector<1x1x256xf32> to vector<1x256xf32>
    %519 = vector.broadcast %72 : f32 to vector<1x256xf32>
    %520 = arith.mulf %519, %518 : vector<1x256xf32>
    %521 = arith.addf %516, %520 : vector<1x256xf32>
    %c1_231 = arith.constant 1 : index
    %c0_232 = arith.constant 0 : index
    %c66_233 = arith.constant 66 : index
    %522 = vector.load %arg5[%c1_231, %c0_232, %c66_233] : memref<2x1x384xf32, #tpu.memory_space<vmem>>, vector<1x1x256xf32>
    %523 = vector.shape_cast %522 : vector<1x1x256xf32> to vector<1x256xf32>
    %524 = vector.broadcast %79 : f32 to vector<1x256xf32>
    %525 = arith.mulf %524, %523 : vector<1x256xf32>
    %526 = arith.addf %521, %525 : vector<1x256xf32>
    %c1_234 = arith.constant 1 : index
    %c0_235 = arith.constant 0 : index
    %c82_236 = arith.constant 82 : index
    %527 = vector.load %arg5[%c1_234, %c0_235, %c82_236] : memref<2x1x384xf32, #tpu.memory_space<vmem>>, vector<1x1x256xf32>
    %528 = vector.shape_cast %527 : vector<1x1x256xf32> to vector<1x256xf32>
    %529 = vector.broadcast %86 : f32 to vector<1x256xf32>
    %530 = arith.mulf %529, %528 : vector<1x256xf32>
    %531 = arith.addf %526, %530 : vector<1x256xf32>
    %c1_237 = arith.constant 1 : index
    %c0_238 = arith.constant 0 : index
    %c98_239 = arith.constant 98 : index
    %532 = vector.load %arg5[%c1_237, %c0_238, %c98_239] : memref<2x1x384xf32, #tpu.memory_space<vmem>>, vector<1x1x256xf32>
    %533 = vector.shape_cast %532 : vector<1x1x256xf32> to vector<1x256xf32>
    %534 = vector.broadcast %93 : f32 to vector<1x256xf32>
    %535 = arith.mulf %534, %533 : vector<1x256xf32>
    %536 = arith.addf %531, %535 : vector<1x256xf32>
    %c1_i32_240 = arith.constant 1 : i32
    %537 = vector.broadcast %c1_i32_240 : i32 to vector<1x256xi32>
    %538 = arith.cmpi sge, %130, %537 : vector<1x256xi32>
    %c17_i32_241 = arith.constant 17 : i32
    %539 = vector.broadcast %c17_i32_241 : i32 to vector<1x256xi32>
    %540 = arith.cmpi slt, %130, %539 : vector<1x256xi32>
    %541 = arith.andi %538, %540 : vector<1x256xi1>
    %cst_242 = arith.constant 0.000000e+00 : f32
    %542 = vector.broadcast %cst_242 : f32 to vector<1x256xf32>
    %543 = arith.select %541, %536, %542 : vector<1x256xi1>, vector<1x256xf32>
    %544 = arith.addf %502, %543 : vector<1x256xf32>
    %c1_243 = arith.constant 1 : index
    %c0_244 = arith.constant 0 : index
    %c3_245 = arith.constant 3 : index
    %545 = vector.load %arg5[%c1_243, %c0_244, %c3_245] : memref<2x1x384xf32, #tpu.memory_space<vmem>>, vector<1x1x256xf32>
    %546 = vector.shape_cast %545 : vector<1x1x256xf32> to vector<1x256xf32>
    %547 = vector.broadcast %52 : f32 to vector<1x256xf32>
    %548 = arith.mulf %547, %546 : vector<1x256xf32>
    %c1_246 = arith.constant 1 : index
    %c0_247 = arith.constant 0 : index
    %c19_248 = arith.constant 19 : index
    %549 = vector.load %arg5[%c1_246, %c0_247, %c19_248] : memref<2x1x384xf32, #tpu.memory_space<vmem>>, vector<1x1x256xf32>
    %550 = vector.shape_cast %549 : vector<1x1x256xf32> to vector<1x256xf32>
    %551 = vector.broadcast %59 : f32 to vector<1x256xf32>
    %552 = arith.mulf %551, %550 : vector<1x256xf32>
    %553 = arith.addf %548, %552 : vector<1x256xf32>
    %c1_249 = arith.constant 1 : index
    %c0_250 = arith.constant 0 : index
    %c35_251 = arith.constant 35 : index
    %554 = vector.load %arg5[%c1_249, %c0_250, %c35_251] : memref<2x1x384xf32, #tpu.memory_space<vmem>>, vector<1x1x256xf32>
    %555 = vector.shape_cast %554 : vector<1x1x256xf32> to vector<1x256xf32>
    %556 = vector.broadcast %66 : f32 to vector<1x256xf32>
    %557 = arith.mulf %556, %555 : vector<1x256xf32>
    %558 = arith.addf %553, %557 : vector<1x256xf32>
    %c1_252 = arith.constant 1 : index
    %c0_253 = arith.constant 0 : index
    %c51_254 = arith.constant 51 : index
    %559 = vector.load %arg5[%c1_252, %c0_253, %c51_254] : memref<2x1x384xf32, #tpu.memory_space<vmem>>, vector<1x1x256xf32>
    %560 = vector.shape_cast %559 : vector<1x1x256xf32> to vector<1x256xf32>
    %561 = vector.broadcast %73 : f32 to vector<1x256xf32>
    %562 = arith.mulf %561, %560 : vector<1x256xf32>
    %563 = arith.addf %558, %562 : vector<1x256xf32>
    %c1_255 = arith.constant 1 : index
    %c0_256 = arith.constant 0 : index
    %c67_257 = arith.constant 67 : index
    %564 = vector.load %arg5[%c1_255, %c0_256, %c67_257] : memref<2x1x384xf32, #tpu.memory_space<vmem>>, vector<1x1x256xf32>
    %565 = vector.shape_cast %564 : vector<1x1x256xf32> to vector<1x256xf32>
    %566 = vector.broadcast %80 : f32 to vector<1x256xf32>
    %567 = arith.mulf %566, %565 : vector<1x256xf32>
    %568 = arith.addf %563, %567 : vector<1x256xf32>
    %c1_258 = arith.constant 1 : index
    %c0_259 = arith.constant 0 : index
    %c83_260 = arith.constant 83 : index
    %569 = vector.load %arg5[%c1_258, %c0_259, %c83_260] : memref<2x1x384xf32, #tpu.memory_space<vmem>>, vector<1x1x256xf32>
    %570 = vector.shape_cast %569 : vector<1x1x256xf32> to vector<1x256xf32>
    %571 = vector.broadcast %87 : f32 to vector<1x256xf32>
    %572 = arith.mulf %571, %570 : vector<1x256xf32>
    %573 = arith.addf %568, %572 : vector<1x256xf32>
    %c1_261 = arith.constant 1 : index
    %c0_262 = arith.constant 0 : index
    %c99_263 = arith.constant 99 : index
    %574 = vector.load %arg5[%c1_261, %c0_262, %c99_263] : memref<2x1x384xf32, #tpu.memory_space<vmem>>, vector<1x1x256xf32>
    %575 = vector.shape_cast %574 : vector<1x1x256xf32> to vector<1x256xf32>
    %576 = vector.broadcast %94 : f32 to vector<1x256xf32>
    %577 = arith.mulf %576, %575 : vector<1x256xf32>
    %578 = arith.addf %573, %577 : vector<1x256xf32>
    %579 = arith.addf %544, %578 : vector<1x256xf32>
    %c1_264 = arith.constant 1 : index
    %c0_265 = arith.constant 0 : index
    %c4_266 = arith.constant 4 : index
    %580 = vector.load %arg5[%c1_264, %c0_265, %c4_266] : memref<2x1x384xf32, #tpu.memory_space<vmem>>, vector<1x1x256xf32>
    %581 = vector.shape_cast %580 : vector<1x1x256xf32> to vector<1x256xf32>
    %582 = vector.broadcast %53 : f32 to vector<1x256xf32>
    %583 = arith.mulf %582, %581 : vector<1x256xf32>
    %c1_267 = arith.constant 1 : index
    %c0_268 = arith.constant 0 : index
    %c20_269 = arith.constant 20 : index
    %584 = vector.load %arg5[%c1_267, %c0_268, %c20_269] : memref<2x1x384xf32, #tpu.memory_space<vmem>>, vector<1x1x256xf32>
    %585 = vector.shape_cast %584 : vector<1x1x256xf32> to vector<1x256xf32>
    %586 = vector.broadcast %60 : f32 to vector<1x256xf32>
    %587 = arith.mulf %586, %585 : vector<1x256xf32>
    %588 = arith.addf %583, %587 : vector<1x256xf32>
    %c1_270 = arith.constant 1 : index
    %c0_271 = arith.constant 0 : index
    %c36_272 = arith.constant 36 : index
    %589 = vector.load %arg5[%c1_270, %c0_271, %c36_272] : memref<2x1x384xf32, #tpu.memory_space<vmem>>, vector<1x1x256xf32>
    %590 = vector.shape_cast %589 : vector<1x1x256xf32> to vector<1x256xf32>
    %591 = vector.broadcast %67 : f32 to vector<1x256xf32>
    %592 = arith.mulf %591, %590 : vector<1x256xf32>
    %593 = arith.addf %588, %592 : vector<1x256xf32>
    %c1_273 = arith.constant 1 : index
    %c0_274 = arith.constant 0 : index
    %c52_275 = arith.constant 52 : index
    %594 = vector.load %arg5[%c1_273, %c0_274, %c52_275] : memref<2x1x384xf32, #tpu.memory_space<vmem>>, vector<1x1x256xf32>
    %595 = vector.shape_cast %594 : vector<1x1x256xf32> to vector<1x256xf32>
    %596 = vector.broadcast %74 : f32 to vector<1x256xf32>
    %597 = arith.mulf %596, %595 : vector<1x256xf32>
    %598 = arith.addf %593, %597 : vector<1x256xf32>
    %c1_276 = arith.constant 1 : index
    %c0_277 = arith.constant 0 : index
    %c68_278 = arith.constant 68 : index
    %599 = vector.load %arg5[%c1_276, %c0_277, %c68_278] : memref<2x1x384xf32, #tpu.memory_space<vmem>>, vector<1x1x256xf32>
    %600 = vector.shape_cast %599 : vector<1x1x256xf32> to vector<1x256xf32>
    %601 = vector.broadcast %81 : f32 to vector<1x256xf32>
    %602 = arith.mulf %601, %600 : vector<1x256xf32>
    %603 = arith.addf %598, %602 : vector<1x256xf32>
    %c1_279 = arith.constant 1 : index
    %c0_280 = arith.constant 0 : index
    %c84_281 = arith.constant 84 : index
    %604 = vector.load %arg5[%c1_279, %c0_280, %c84_281] : memref<2x1x384xf32, #tpu.memory_space<vmem>>, vector<1x1x256xf32>
    %605 = vector.shape_cast %604 : vector<1x1x256xf32> to vector<1x256xf32>
    %606 = vector.broadcast %88 : f32 to vector<1x256xf32>
    %607 = arith.mulf %606, %605 : vector<1x256xf32>
    %608 = arith.addf %603, %607 : vector<1x256xf32>
    %c1_282 = arith.constant 1 : index
    %c0_283 = arith.constant 0 : index
    %c100_284 = arith.constant 100 : index
    %609 = vector.load %arg5[%c1_282, %c0_283, %c100_284] : memref<2x1x384xf32, #tpu.memory_space<vmem>>, vector<1x1x256xf32>
    %610 = vector.shape_cast %609 : vector<1x1x256xf32> to vector<1x256xf32>
    %611 = vector.broadcast %95 : f32 to vector<1x256xf32>
    %612 = arith.mulf %611, %610 : vector<1x256xf32>
    %613 = arith.addf %608, %612 : vector<1x256xf32>
    %c-1_i32_285 = arith.constant -1 : i32
    %614 = vector.broadcast %c-1_i32_285 : i32 to vector<1x256xi32>
    %615 = arith.cmpi sge, %130, %614 : vector<1x256xi32>
    %c15_i32_286 = arith.constant 15 : i32
    %616 = vector.broadcast %c15_i32_286 : i32 to vector<1x256xi32>
    %617 = arith.cmpi slt, %130, %616 : vector<1x256xi32>
    %618 = arith.andi %615, %617 : vector<1x256xi1>
    %cst_287 = arith.constant 0.000000e+00 : f32
    %619 = vector.broadcast %cst_287 : f32 to vector<1x256xf32>
    %620 = arith.select %618, %613, %619 : vector<1x256xi1>, vector<1x256xf32>
    %621 = arith.addf %579, %620 : vector<1x256xf32>
    %c1_288 = arith.constant 1 : index
    %c0_289 = arith.constant 0 : index
    %c5_290 = arith.constant 5 : index
    %622 = vector.load %arg5[%c1_288, %c0_289, %c5_290] : memref<2x1x384xf32, #tpu.memory_space<vmem>>, vector<1x1x256xf32>
    %623 = vector.shape_cast %622 : vector<1x1x256xf32> to vector<1x256xf32>
    %624 = vector.broadcast %54 : f32 to vector<1x256xf32>
    %625 = arith.mulf %624, %623 : vector<1x256xf32>
    %c1_291 = arith.constant 1 : index
    %c0_292 = arith.constant 0 : index
    %c21_293 = arith.constant 21 : index
    %626 = vector.load %arg5[%c1_291, %c0_292, %c21_293] : memref<2x1x384xf32, #tpu.memory_space<vmem>>, vector<1x1x256xf32>
    %627 = vector.shape_cast %626 : vector<1x1x256xf32> to vector<1x256xf32>
    %628 = vector.broadcast %61 : f32 to vector<1x256xf32>
    %629 = arith.mulf %628, %627 : vector<1x256xf32>
    %630 = arith.addf %625, %629 : vector<1x256xf32>
    %c1_294 = arith.constant 1 : index
    %c0_295 = arith.constant 0 : index
    %c37_296 = arith.constant 37 : index
    %631 = vector.load %arg5[%c1_294, %c0_295, %c37_296] : memref<2x1x384xf32, #tpu.memory_space<vmem>>, vector<1x1x256xf32>
    %632 = vector.shape_cast %631 : vector<1x1x256xf32> to vector<1x256xf32>
    %633 = vector.broadcast %68 : f32 to vector<1x256xf32>
    %634 = arith.mulf %633, %632 : vector<1x256xf32>
    %635 = arith.addf %630, %634 : vector<1x256xf32>
    %c1_297 = arith.constant 1 : index
    %c0_298 = arith.constant 0 : index
    %c53_299 = arith.constant 53 : index
    %636 = vector.load %arg5[%c1_297, %c0_298, %c53_299] : memref<2x1x384xf32, #tpu.memory_space<vmem>>, vector<1x1x256xf32>
    %637 = vector.shape_cast %636 : vector<1x1x256xf32> to vector<1x256xf32>
    %638 = vector.broadcast %75 : f32 to vector<1x256xf32>
    %639 = arith.mulf %638, %637 : vector<1x256xf32>
    %640 = arith.addf %635, %639 : vector<1x256xf32>
    %c1_300 = arith.constant 1 : index
    %c0_301 = arith.constant 0 : index
    %c69_302 = arith.constant 69 : index
    %641 = vector.load %arg5[%c1_300, %c0_301, %c69_302] : memref<2x1x384xf32, #tpu.memory_space<vmem>>, vector<1x1x256xf32>
    %642 = vector.shape_cast %641 : vector<1x1x256xf32> to vector<1x256xf32>
    %643 = vector.broadcast %82 : f32 to vector<1x256xf32>
    %644 = arith.mulf %643, %642 : vector<1x256xf32>
    %645 = arith.addf %640, %644 : vector<1x256xf32>
    %c1_303 = arith.constant 1 : index
    %c0_304 = arith.constant 0 : index
    %c85_305 = arith.constant 85 : index
    %646 = vector.load %arg5[%c1_303, %c0_304, %c85_305] : memref<2x1x384xf32, #tpu.memory_space<vmem>>, vector<1x1x256xf32>
    %647 = vector.shape_cast %646 : vector<1x1x256xf32> to vector<1x256xf32>
    %648 = vector.broadcast %89 : f32 to vector<1x256xf32>
    %649 = arith.mulf %648, %647 : vector<1x256xf32>
    %650 = arith.addf %645, %649 : vector<1x256xf32>
    %c1_306 = arith.constant 1 : index
    %c0_307 = arith.constant 0 : index
    %c101_308 = arith.constant 101 : index
    %651 = vector.load %arg5[%c1_306, %c0_307, %c101_308] : memref<2x1x384xf32, #tpu.memory_space<vmem>>, vector<1x1x256xf32>
    %652 = vector.shape_cast %651 : vector<1x1x256xf32> to vector<1x256xf32>
    %653 = vector.broadcast %96 : f32 to vector<1x256xf32>
    %654 = arith.mulf %653, %652 : vector<1x256xf32>
    %655 = arith.addf %650, %654 : vector<1x256xf32>
    %c-2_i32_309 = arith.constant -2 : i32
    %656 = vector.broadcast %c-2_i32_309 : i32 to vector<1x256xi32>
    %657 = arith.cmpi sge, %130, %656 : vector<1x256xi32>
    %c14_i32_310 = arith.constant 14 : i32
    %658 = vector.broadcast %c14_i32_310 : i32 to vector<1x256xi32>
    %659 = arith.cmpi slt, %130, %658 : vector<1x256xi32>
    %660 = arith.andi %657, %659 : vector<1x256xi1>
    %cst_311 = arith.constant 0.000000e+00 : f32
    %661 = vector.broadcast %cst_311 : f32 to vector<1x256xf32>
    %662 = arith.select %660, %655, %661 : vector<1x256xi1>, vector<1x256xf32>
    %663 = arith.addf %621, %662 : vector<1x256xf32>
    %c1_312 = arith.constant 1 : index
    %c0_313 = arith.constant 0 : index
    %c6_314 = arith.constant 6 : index
    %664 = vector.load %arg5[%c1_312, %c0_313, %c6_314] : memref<2x1x384xf32, #tpu.memory_space<vmem>>, vector<1x1x256xf32>
    %665 = vector.shape_cast %664 : vector<1x1x256xf32> to vector<1x256xf32>
    %666 = vector.broadcast %55 : f32 to vector<1x256xf32>
    %667 = arith.mulf %666, %665 : vector<1x256xf32>
    %c1_315 = arith.constant 1 : index
    %c0_316 = arith.constant 0 : index
    %c22_317 = arith.constant 22 : index
    %668 = vector.load %arg5[%c1_315, %c0_316, %c22_317] : memref<2x1x384xf32, #tpu.memory_space<vmem>>, vector<1x1x256xf32>
    %669 = vector.shape_cast %668 : vector<1x1x256xf32> to vector<1x256xf32>
    %670 = vector.broadcast %62 : f32 to vector<1x256xf32>
    %671 = arith.mulf %670, %669 : vector<1x256xf32>
    %672 = arith.addf %667, %671 : vector<1x256xf32>
    %c1_318 = arith.constant 1 : index
    %c0_319 = arith.constant 0 : index
    %c38_320 = arith.constant 38 : index
    %673 = vector.load %arg5[%c1_318, %c0_319, %c38_320] : memref<2x1x384xf32, #tpu.memory_space<vmem>>, vector<1x1x256xf32>
    %674 = vector.shape_cast %673 : vector<1x1x256xf32> to vector<1x256xf32>
    %675 = vector.broadcast %69 : f32 to vector<1x256xf32>
    %676 = arith.mulf %675, %674 : vector<1x256xf32>
    %677 = arith.addf %672, %676 : vector<1x256xf32>
    %c1_321 = arith.constant 1 : index
    %c0_322 = arith.constant 0 : index
    %c54_323 = arith.constant 54 : index
    %678 = vector.load %arg5[%c1_321, %c0_322, %c54_323] : memref<2x1x384xf32, #tpu.memory_space<vmem>>, vector<1x1x256xf32>
    %679 = vector.shape_cast %678 : vector<1x1x256xf32> to vector<1x256xf32>
    %680 = vector.broadcast %76 : f32 to vector<1x256xf32>
    %681 = arith.mulf %680, %679 : vector<1x256xf32>
    %682 = arith.addf %677, %681 : vector<1x256xf32>
    %c1_324 = arith.constant 1 : index
    %c0_325 = arith.constant 0 : index
    %c70_326 = arith.constant 70 : index
    %683 = vector.load %arg5[%c1_324, %c0_325, %c70_326] : memref<2x1x384xf32, #tpu.memory_space<vmem>>, vector<1x1x256xf32>
    %684 = vector.shape_cast %683 : vector<1x1x256xf32> to vector<1x256xf32>
    %685 = vector.broadcast %83 : f32 to vector<1x256xf32>
    %686 = arith.mulf %685, %684 : vector<1x256xf32>
    %687 = arith.addf %682, %686 : vector<1x256xf32>
    %c1_327 = arith.constant 1 : index
    %c0_328 = arith.constant 0 : index
    %c86_329 = arith.constant 86 : index
    %688 = vector.load %arg5[%c1_327, %c0_328, %c86_329] : memref<2x1x384xf32, #tpu.memory_space<vmem>>, vector<1x1x256xf32>
    %689 = vector.shape_cast %688 : vector<1x1x256xf32> to vector<1x256xf32>
    %690 = vector.broadcast %90 : f32 to vector<1x256xf32>
    %691 = arith.mulf %690, %689 : vector<1x256xf32>
    %692 = arith.addf %687, %691 : vector<1x256xf32>
    %c1_330 = arith.constant 1 : index
    %c0_331 = arith.constant 0 : index
    %c102_332 = arith.constant 102 : index
    %693 = vector.load %arg5[%c1_330, %c0_331, %c102_332] : memref<2x1x384xf32, #tpu.memory_space<vmem>>, vector<1x1x256xf32>
    %694 = vector.shape_cast %693 : vector<1x1x256xf32> to vector<1x256xf32>
    %695 = vector.broadcast %97 : f32 to vector<1x256xf32>
    %696 = arith.mulf %695, %694 : vector<1x256xf32>
    %697 = arith.addf %692, %696 : vector<1x256xf32>
    %c-3_i32_333 = arith.constant -3 : i32
    %698 = vector.broadcast %c-3_i32_333 : i32 to vector<1x256xi32>
    %699 = arith.cmpi sge, %130, %698 : vector<1x256xi32>
    %c13_i32_334 = arith.constant 13 : i32
    %700 = vector.broadcast %c13_i32_334 : i32 to vector<1x256xi32>
    %701 = arith.cmpi slt, %130, %700 : vector<1x256xi32>
    %702 = arith.andi %699, %701 : vector<1x256xi1>
    %cst_335 = arith.constant 0.000000e+00 : f32
    %703 = vector.broadcast %cst_335 : f32 to vector<1x256xf32>
    %704 = arith.select %702, %697, %703 : vector<1x256xi1>, vector<1x256xf32>
    %705 = arith.addf %663, %704 : vector<1x256xf32>
    %706 = arith.negf %705 : vector<1x256xf32>
    %707 = math.exp %706 : vector<1x256xf32>
    %cst_336 = arith.constant 1.000000e+00 : f32
    %708 = vector.broadcast %cst_336 : f32 to vector<1x256xf32>
    %709 = arith.addf %708, %707 : vector<1x256xf32>
    %710 = arith.divf %708, %709 : vector<1x256xf32>
    %c0_337 = arith.constant 0 : index
    %c0_338 = arith.constant 0 : index
    %c0_339 = arith.constant 0 : index
    %711 = vector.load %arg4[%c0_337, %c0_338, %c0_339] : memref<1x1x256xf32, #tpu.memory_space<vmem>>, vector<1x1x256xf32>
    %712 = vector.shape_cast %711 : vector<1x1x256xf32> to vector<1x256xf32>
    %713 = vector.shape_cast %710 : vector<1x256xf32> to vector<1x1x256xf32>
    tpu.vector_store %arg4[%c0_337, %c0_338, %c0_339], %713 {strides = array<i32>} : memref<1x1x256xf32, #tpu.memory_space<vmem>>, vector<1x1x256xf32>,
    return
  }
  func.func @transform_0(%arg0: i32) -> i32 {
    %c0_i32 = arith.constant 0 : i32
    %c0_i32_0 = arith.constant 0 : i32
    return %c0_i32 : i32
  }
  func.func @transform_1(%arg0: i32) -> i32 {
    %c0_i32 = arith.constant 0 : i32
    %c0_i32_0 = arith.constant 0 : i32
    return %c0_i32 : i32
  }
  func.func @transform_2(%arg0: i32) -> (i32, i32, i32) {
    %c0_i32 = arith.constant 0 : i32
    %c0_i32_0 = arith.constant 0 : i32
    %c0_i32_1 = arith.constant 0 : i32
    return %arg0, %c0_i32, %c0_i32_0 : i32, i32, i32
  }
  func.func @transform_3(%arg0: i32) -> (i32, i32, i32) {
    %c0_i32 = arith.constant 0 : i32
    %c0_i32_0 = arith.constant 0 : i32
    %c0_i32_1 = arith.constant 0 : i32
    return %arg0, %c0_i32, %c0_i32_0 : i32, i32, i32
  }
}

</mosaic_0001>

<llo_original>
// kernel: tpu_custom_call.1
$region0: #{tpu_custom_call.1}
  #allocation0 [shape = 'u32[]', space=smem, size = 0x4, offset = 0x4, fixed_abs, tag = 'smem constant byte address 0x4 - core index']
  #allocation1 [shape = 'u32[144,128]{1,0:T(1,128)}', space=vmem, size = 0x12000, scoped, tag = 'internal scratch']
  #allocation2 [shape = 'f32[2,1,384]{2,1,0:T(1,128)}', space=vmem, size = 0xc00, scoped, tag = 'scratch operand']
  #allocation3 [shape = 'f32[1]{0:T(128)S(6)}', space=smem, size = 0x200, scoped, tag = 'scoped memory for tpu_custom_call.1']
  %s0 = inlined_call_operand.vmem [shape: f32[98], index: 0, kind: input, shape index: {}]
  %s1 = inlined_call_operand.<no memory space> [shape: f32[1], index: 1, kind: input, shape index: {}]
  %s2 = inlined_call_operand.hbm [shape: f32[2,4,256], index: 2, kind: input, shape index: {}]
  %s3 = inlined_call_operand.hbm [shape: f32[2,1,256], index: 3, kind: output, shape index: {}]
  %s4 = sld [smem:[#allocation0]]
  $region53: #{tpu_custom_call.1} parent=0
    _
  %s6 = ssub.s32 1, %s4
  %s7 = scalar_select 0, %s6, %s4
  %8 = sst [smem:[#allocation3]] %s1
  $region1: #{tpu_custom_call.1} parent=0
    #allocation4 [shape = 'u8[512]{0}', space=smem, size = 0x200, scoped, tag = 'input window, operand 0, single buffered']
    #allocation5 [shape = 's32[2]{0}', space=sflag, size = 0x8, scoped, tag = 'scoped memory for tpu_custom_call.1']
    #allocation6 [shape = 's32[2]{0}', space=sflag, size = 0x8, scoped, tag = 'scoped memory for tpu_custom_call.1']
    #allocation7 [shape = 's32[2]{0}', space=sflag, size = 0x8, scoped, tag = 'scoped memory for tpu_custom_call.1']
    #allocation8 [shape = 'u8[8192]{0}', space=vmem, size = 0x2000, scoped, tag = 'input window, operand 2']
    #allocation9 [shape = 'u8[2048]{0}', space=vmem, size = 0x800, scoped, tag = 'output window, operand 0']
    %9 = vsyncpa [#allocation7], 0
    %10 = vsyncpa [#allocation5], 0
    %s11 = scalar_lea.sflag [#allocation5], 1
    %12 = vsyncpa %s11, 0
    %13 = vsyncpa [#allocation6], 0
    %s14 = scalar_lea.sflag [#allocation6], 1
    %15 = vsyncpa %s14, 0
    loop: start=0, step=1, limit=4
    $region2: #{tpu_custom_call.1} parent=1 // loop_pre_header
      _
    $region3: #{tpu_custom_call.1} parent=1 // loop_header
      %s17 = sphi 0, %s21
      %p18 = scmp.ge.s32.totalorder %s17, 4
      %s25 = sphi 0, %s25
      %s27 = sphi 0, %s25
      %s28 = sphi 0, %s27
      %s42 = sphi 0, %s28
      %s46 = sphi 0, %s46
      %s48 = sphi 0, %s46
      %s49 = sphi 0, %s48
      %s63 = sphi 0, %s49
      %s69 = sphi 0, %s71
      %s72 = sphi 0, %s69
      %s73 = sphi 0, %s72
      %s89 = sphi 0, %s73
      %s95 = sphi 0, %s97
      %s98 = sphi 0, %s95
      %s99 = sphi 0, %s98
      %s115 = sphi 0, %s99
    $region4: #{tpu_custom_call.1} parent=1 // loop_header_branch
      %20 = sbr.rel (%p18) target = $region8
    $region5: #{tpu_custom_call.1} parent=1 // loop_body
      %s22 = ssub.s32 %s17, 1
      %s23 = ssub.s32 %s17, 2
      %s24 = sadd.s32 %s17, 1
      %s26 = sadd.s32 %s25, 1
      %p29 = scmp.eq.s32.totalorder %s17, 1
      %p30 = scmp.ne.s32.totalorder %s25, %s27
      %p31 = scmp.eq.s32.totalorder %s17, 0
      %p32 = por %p30, %p31
      %p33 = scmp.ne.s32.totalorder %s25, %s27
      %p34 = scmp.eq.s32.totalorder %s22, 1
      %p35 = por %p33, %p34
      %p36 = scmp.ne.s32.totalorder %s27, %s28
      %p37 = scmp.eq.s32.totalorder %s22, 0
      %p38 = por %p36, %p37
      %p39 = scmp.ne.s32.totalorder %s27, %s28
      %p40 = scmp.eq.s32.totalorder %s23, 1
      %p41 = por %p39, %p40
      %p43 = scmp.ne.s32.totalorder %s28, %s42
      %p44 = scmp.eq.s32.totalorder %s23, 0
      %p45 = por %p43, %p44
      %s47 = sadd.s32 %s46, 1
      %p50 = scmp.eq.s32.totalorder %s17, 1
      %p51 = scmp.ne.s32.totalorder %s46, %s48
      %p52 = scmp.eq.s32.totalorder %s17, 0
      %p53 = por %p51, %p52
      %p54 = scmp.ne.s32.totalorder %s46, %s48
      %p55 = scmp.eq.s32.totalorder %s22, 1
      %p56 = por %p54, %p55
      %p57 = scmp.ne.s32.totalorder %s48, %s49
      %p58 = scmp.eq.s32.totalorder %s22, 0
      %p59 = por %p57, %p58
      %p60 = scmp.ne.s32.totalorder %s48, %s49
      %p61 = scmp.eq.s32.totalorder %s23, 1
      %p62 = por %p60, %p61
      %p64 = scmp.ne.s32.totalorder %s49, %s63
      %p65 = scmp.eq.s32.totalorder %s23, 0
      %p66 = por %p64, %p65
      %s67 = ssub.s32 %s17, %s24
      %p68 = scmp.eq.s32.totalorder %s67, 0
      %s70 = sadd.s32 %s69, 1
      %s71 = scalar_select %p68, %s69, %s70
      %p74 = pneg %p68
      %p75 = scmp.eq.s32.totalorder %s17, 1
      %p76 = por %p74, %p75
      %p77 = scmp.ne.s32.totalorder %s69, %s72
      %p78 = scmp.eq.s32.totalorder %s17, 0
      %p79 = por %p77, %p78
      %p80 = scmp.ne.s32.totalorder %s69, %s72
      %p81 = scmp.eq.s32.totalorder %s22, 1
      %p82 = por %p80, %p81
      %p83 = scmp.ne.s32.totalorder %s72, %s73
      %p84 = scmp.eq.s32.totalorder %s22, 0
      %p85 = por %p83, %p84
      %p86 = scmp.ne.s32.totalorder %s72, %s73
      %p87 = scmp.eq.s32.totalorder %s23, 1
      %p88 = por %p86, %p87
      %p90 = scmp.ne.s32.totalorder %s73, %s89
      %p91 = scmp.eq.s32.totalorder %s23, 0
      %p92 = por %p90, %p91
      %s93 = ssub.s32 %s17, %s24
      %p94 = scmp.eq.s32.totalorder %s93, 0
      %s96 = sadd.s32 %s95, 1
      %s97 = scalar_select %p94, %s95, %s96
      %p100 = pneg %p94
      %p101 = scmp.eq.s32.totalorder %s17, 1
      %p102 = por %p100, %p101
      %p103 = scmp.ne.s32.totalorder %s95, %s98
      %p104 = scmp.eq.s32.totalorder %s17, 0
      %p105 = por %p103, %p104
      %p106 = scmp.ne.s32.totalorder %s95, %s98
      %p107 = scmp.eq.s32.totalorder %s22, 1
      %p108 = por %p106, %p107
      %p109 = scmp.ne.s32.totalorder %s98, %s99
      %p110 = scmp.eq.s32.totalorder %s22, 0
      %p111 = por %p109, %p110
      %p112 = scmp.ne.s32.totalorder %s98, %s99
      %p113 = scmp.eq.s32.totalorder %s23, 1
      %p114 = por %p112, %p113
      %p116 = scmp.ne.s32.totalorder %s99, %s115
      %p117 = scmp.eq.s32.totalorder %s23, 0
      %p118 = por %p116, %p117
      %p119 = scmp.le.s32.totalorder 1, %s17
      %p120 = scmp.lt.s32.totalorder %s17, 3
      %p121 = pnand %p119, %p120
      %p122 = pneg %p121
      // Predicated region
      $region9: #{tpu_custom_call.1} parent=5 // pred_check
        _
      $region10: #{tpu_custom_call.1} parent=5 // pred_check_branch
        %124 = sbr.rel (%p121) target = $region12
      $region11: #{tpu_custom_call.1} parent=5 // pred_region
        %s125 = ssub.s32 %s17, 1
        // Predicated region
        $region13: #{tpu_custom_call.1} parent=11 // pred_check
          %p126 = pneg %p38
        $region14: #{tpu_custom_call.1} parent=11 // pred_check_branch
          %128 = sbr.rel (%p126) target = $region16
        $region15: #{tpu_custom_call.1} parent=11 // pred_region
          %s130 = ssub.s32 16, 16
          %131 = vsyncadd [#allocation7], %s130
          %s133 = sshll.u32 %s0, 4
          %s134 = int_to_ptr.vmem [resolvable:$true] %s133
          %136 = dma.vmem_to_smem %s134, 16, [#allocation4], [#allocation7]
        $region16: #{tpu_custom_call.1} parent=11 // pred_fallthru
          _
        // Predicated region
        $region17: #{tpu_custom_call.1} parent=11 // pred_check
          %p137 = pneg %p59
        $region18: #{tpu_custom_call.1} parent=11 // pred_check_branch
          %139 = sbr.rel (%p137) target = $region20
        $region19: #{tpu_custom_call.1} parent=11 // pred_region
          _
        $region20: #{tpu_custom_call.1} parent=11 // pred_fallthru
          _
      $region12: #{tpu_custom_call.1} parent=5 // pred_fallthru
        _
      %p140 = scmp.lt.s32.totalorder %s17, 2
      // Predicated region
      $region21: #{tpu_custom_call.1} parent=5 // pred_check
        %p141 = pneg %p140
      $region22: #{tpu_custom_call.1} parent=5 // pred_check_branch
        %143 = sbr.rel (%p141) target = $region24
      $region23: #{tpu_custom_call.1} parent=5 // pred_region
        // Predicated region
        $region25: #{tpu_custom_call.1} parent=23 // pred_check
          %p144 = pneg %p79
        $region26: #{tpu_custom_call.1} parent=23 // pred_check_branch
          %146 = sbr.rel (%p144) target = $region28
        $region27: #{tpu_custom_call.1} parent=23 // pred_region
          %s147 = sand.u32 %s69, 1
          %s148 = scalar_lea.sflag [#allocation5], %s147
          %s149 = sand.u32 %s69, 1
          %s150 = smul.addr %s149, 8
          %s151 = scalar_lea.vmem [#allocation8], %s150
          %s153 = ssub.s32 128, 128
          %154 = vsyncadd %s148, %s153
          %s155 = smul.addr %s17, 2
          %s156 = smul.addr %s155, 64
          %s157 = scalar_lea.hbm %s2, %s156
          %s159 = sshll.u32 %s151, 4
          %s160 = int_to_ptr.vmem [resolvable:$true] %s159
          %162 = dma.hbm_to_vmem [thread:$0]  %s157, 128, %s160, %s148
        $region28: #{tpu_custom_call.1} parent=23 // pred_fallthru
          _
      $region24: #{tpu_custom_call.1} parent=5 // pred_fallthru
        _
      %p163 = scmp.le.s32.totalorder 1, %s17
      %p164 = scmp.lt.s32.totalorder %s17, 3
      %p165 = pnand %p163, %p164
      %p166 = pneg %p165
      // Predicated region
      $region29: #{tpu_custom_call.1} parent=5 // pred_check
        _
      $region30: #{tpu_custom_call.1} parent=5 // pred_check_branch
        %168 = sbr.rel (%p165) target = $region32
      $region31: #{tpu_custom_call.1} parent=5 // pred_region
        %s169 = ssub.s32 %s17, 1
        // Predicated region
        $region33: #{tpu_custom_call.1} parent=31 // pred_check
          %p170 = pneg %p38
        $region34: #{tpu_custom_call.1} parent=31 // pred_check_branch
          %172 = sbr.rel (%p170) target = $region36
        $region35: #{tpu_custom_call.1} parent=31 // pred_region
          %173 = dma.done [#allocation7], 16
        $region36: #{tpu_custom_call.1} parent=31 // pred_fallthru
          _
        %s174 = sand.u32 %s72, 1
        %s175 = scalar_lea.sflag [#allocation5], %s174
        %s176 = sand.u32 %s72, 1
        %s177 = smul.addr %s176, 8
        %s178 = scalar_lea.vmem [#allocation8], %s177
        // Predicated region
        $region37: #{tpu_custom_call.1} parent=31 // pred_check
          %p179 = pneg %p85
        $region38: #{tpu_custom_call.1} parent=31 // pred_check_branch
          %181 = sbr.rel (%p179) target = $region40
        $region39: #{tpu_custom_call.1} parent=31 // pred_region
          %182 = dma.done %s175, 128
        $region40: #{tpu_custom_call.1} parent=31 // pred_fallthru
          _
        %183 = sfence
        %p184 = pneg %p38
        %p185 = pneg %p35
        %p186 = pneg %p59
        %p187 = pneg %p56
        %s188 = sand.u32 %s72, 1
        %s189 = scalar_lea.sflag [#allocation5], %s188
        %s190 = sand.u32 %s72, 1
        %s191 = smul.addr %s190, 8
        %s192 = scalar_lea.vmem [#allocation8], %s191
        %p193 = pneg %p85
        %p194 = pneg %p82
        %p195 = pneg %p111
        %p196 = pneg %p108
        %s197 = sand.u32 %s98, 1
        %s198 = scalar_lea.sflag [#allocation6], %s197
        %s199 = sand.u32 %s98, 1
        %s200 = smul.addr %s199, 2
        %s201 = scalar_lea.vmem [#allocation9], %s200
        %s202 = sld [smem:[#allocation4]]
        %s203 = sld [smem:[#allocation4 + $0x1]]
        %s204 = sld [smem:[#allocation4 + $0x2]]
        %s205 = sld [smem:[#allocation4 + $0x3]]
        %s206 = sld [smem:[#allocation4 + $0x4]]
        %s207 = sld [smem:[#allocation4 + $0x5]]
        %s208 = sld [smem:[#allocation4 + $0x6]]
        %s209 = sld [smem:[#allocation4 + $0x7]]
        %s210 = sld [smem:[#allocation4 + $0x8]]
        %s211 = sld [smem:[#allocation4 + $0x9]]
        %s212 = sld [smem:[#allocation4 + $0xa]]
        %s213 = sld [smem:[#allocation4 + $0xb]]
        %s214 = sld [smem:[#allocation4 + $0xc]]
        %s215 = sld [smem:[#allocation4 + $0xd]]
        %s216 = sld [smem:[#allocation4 + $0xe]]
        %s217 = sld [smem:[#allocation4 + $0xf]]
        %s218 = sld [smem:[#allocation4 + $0x10]]
        %s219 = sld [smem:[#allocation4 + $0x11]]
        %s220 = sld [smem:[#allocation4 + $0x12]]
        %s221 = sld [smem:[#allocation4 + $0x13]]
        %s222 = sld [smem:[#allocation4 + $0x14]]
        %s223 = sld [smem:[#allocation4 + $0x15]]
        %s224 = sld [smem:[#allocation4 + $0x16]]
        %s225 = sld [smem:[#allocation4 + $0x17]]
        %s226 = sld [smem:[#allocation4 + $0x18]]
        %s227 = sld [smem:[#allocation4 + $0x19]]
        %s228 = sld [smem:[#allocation4 + $0x1a]]
        %s229 = sld [smem:[#allocation4 + $0x1b]]
        %s230 = sld [smem:[#allocation4 + $0x1c]]
        %s231 = sld [smem:[#allocation4 + $0x1d]]
        %s232 = sld [smem:[#allocation4 + $0x1e]]
        %s233 = sld [smem:[#allocation4 + $0x1f]]
        %s234 = sld [smem:[#allocation4 + $0x20]]
        %s235 = sld [smem:[#allocation4 + $0x21]]
        %s236 = sld [smem:[#allocation4 + $0x22]]
        %s237 = sld [smem:[#allocation4 + $0x23]]
        %s238 = sld [smem:[#allocation4 + $0x24]]
        %s239 = sld [smem:[#allocation4 + $0x25]]
        %s240 = sld [smem:[#allocation4 + $0x26]]
        %s241 = sld [smem:[#allocation4 + $0x27]]
        %s242 = sld [smem:[#allocation4 + $0x28]]
        %s243 = sld [smem:[#allocation4 + $0x29]]
        %s244 = sld [smem:[#allocation4 + $0x2a]]
        %s245 = sld [smem:[#allocation4 + $0x2b]]
        %s246 = sld [smem:[#allocation4 + $0x2c]]
        %s247 = sld [smem:[#allocation4 + $0x2d]]
        %s248 = sld [smem:[#allocation4 + $0x2e]]
        %s249 = sld [smem:[#allocation4 + $0x2f]]
        %s250 = sld [smem:[#allocation4 + $0x30]]
        %s251 = sld [smem:[#allocation4 + $0x31]]
        %s252 = sld [smem:[#allocation4 + $0x32]]
        %s253 = sld [smem:[#allocation4 + $0x33]]
        %s254 = sld [smem:[#allocation4 + $0x34]]
        %s255 = sld [smem:[#allocation4 + $0x35]]
        %s256 = sld [smem:[#allocation4 + $0x36]]
        %s257 = sld [smem:[#allocation4 + $0x37]]
        %s258 = sld [smem:[#allocation4 + $0x38]]
        %s259 = sld [smem:[#allocation4 + $0x39]]
        %s260 = sld [smem:[#allocation4 + $0x3a]]
        %s261 = sld [smem:[#allocation4 + $0x3b]]
        %s262 = sld [smem:[#allocation4 + $0x3c]]
        %s263 = sld [smem:[#allocation4 + $0x3d]]
        %s264 = sld [smem:[#allocation4 + $0x3e]]
        %s265 = sld [smem:[#allocation4 + $0x3f]]
        %s266 = sld [smem:[#allocation4 + $0x40]]
        %s267 = sld [smem:[#allocation4 + $0x41]]
        %s268 = sld [smem:[#allocation4 + $0x42]]
        %s269 = sld [smem:[#allocation4 + $0x43]]
        %s270 = sld [smem:[#allocation4 + $0x44]]
        %s271 = sld [smem:[#allocation4 + $0x45]]
        %s272 = sld [smem:[#allocation4 + $0x46]]
        %s273 = sld [smem:[#allocation4 + $0x47]]
        %s274 = sld [smem:[#allocation4 + $0x48]]
        %s275 = sld [smem:[#allocation4 + $0x49]]
        %s276 = sld [smem:[#allocation4 + $0x4a]]
        %s277 = sld [smem:[#allocation4 + $0x4b]]
        %s278 = sld [smem:[#allocation4 + $0x4c]]
        %s279 = sld [smem:[#allocation4 + $0x4d]]
        %s280 = sld [smem:[#allocation4 + $0x4e]]
        %s281 = sld [smem:[#allocation4 + $0x4f]]
        %s282 = sld [smem:[#allocation4 + $0x50]]
        %s283 = sld [smem:[#allocation4 + $0x51]]
        %s284 = sld [smem:[#allocation4 + $0x52]]
        %s285 = sld [smem:[#allocation4 + $0x53]]
        %s286 = sld [smem:[#allocation4 + $0x54]]
        %s287 = sld [smem:[#allocation4 + $0x55]]
        %s288 = sld [smem:[#allocation4 + $0x56]]
        %s289 = sld [smem:[#allocation4 + $0x57]]
        %s290 = sld [smem:[#allocation4 + $0x58]]
        %s291 = sld [smem:[#allocation4 + $0x59]]
        %s292 = sld [smem:[#allocation4 + $0x5a]]
        %s293 = sld [smem:[#allocation4 + $0x5b]]
        %s294 = sld [smem:[#allocation4 + $0x5c]]
        %s295 = sld [smem:[#allocation4 + $0x5d]]
        %s296 = sld [smem:[#allocation4 + $0x5e]]
        %s297 = sld [smem:[#allocation4 + $0x5f]]
        %s298 = sld [smem:[#allocation4 + $0x60]]
        %s299 = sld [smem:[#allocation4 + $0x61]]
        %s300 = sld [smem:[#allocation3]]
        %v301 = vlaneseq
        %vm302 = vcmp.ge.s32.totalorder %v301, 0
        %vm303 = vcmp.lt.s32.totalorder %v301, 51
        %vm304 = vmand %vm302, %vm303
        %305 = vst.msk [vmem:[#allocation2] sm:$0x1] %vm304, 0.0
        %306 = vst.msk [vmem:[#allocation2 + $0x3] sm:$0x1] %vm304, 0.0
        %vm307 = vcmp.ge.s32.totalorder %v301, 51
        %vm308 = vcmp.lt.s32.totalorder %v301, 128
        %vm309 = vmand %vm307, %vm308
        %310 = vst.msk [vmem:[#allocation2 + $0x2] sm:$0x1] %vm309, 0.0
        %311 = vst.msk [vmem:[#allocation2 + $0x5] sm:$0x1] %vm309, 0.0
        %v312 = vld [vmem:[%s178] sm:$0xff]
        %v314 = vcombine.high %v312, %v312
        %vm316 = vcmask 1043456
        %v317 = vsel %vm316, %v312, -inf
        %v318 = vrot.slane %v317, 4
        %v319 = vmax.f32 %v317, %v318
        %v320 = vrot.slane %v319, 2
        %v321 = vmax.f32 %v319, %v320
        %v322 = vrot.slane %v321, 1
        %v323 = vmax.f32 %v321, %v322
        %v324 = vsel %vm316, %v314, -inf
        %v325 = vrot.slane %v324, 4
        %v326 = vmax.f32 %v324, %v325
        %v327 = vrot.slane %v326, 2
        %v328 = vmax.f32 %v326, %v327
        %v329 = vrot.slane %v328, 1
        %v330 = vmax.f32 %v328, %v329
        %v331 = vsel %vm316, %v312, 0.0
        %v332 = vrot.slane %v331, 4
        %v333 = vadd.f32 %v331, %v332
        %v334 = vrot.slane %v333, 2
        %v335 = vadd.f32 %v333, %v334
        %v336 = vrot.slane %v335, 1
        %v337 = vadd.f32 %v335, %v336
        %v338 = vsel %vm316, %v314, 0.0
        %v339 = vrot.slane %v338, 4
        %v340 = vadd.f32 %v338, %v339
        %v341 = vrot.slane %v340, 2
        %v342 = vadd.f32 %v340, %v341
        %v343 = vrot.slane %v342, 1
        %v344 = vadd.f32 %v342, %v343
        %v345 = vmul.f32 %v337, 0.25
        %v346 = vmul.f32 %v344, 0.25
        %v349 = vcombine.low %v323, %v330
        %v351 = vunpack.c.l.s4 1966171168
        %v352 = vunpack.c.0.s8 %v351
        %v353 = vlaneseq
        %v354 = vshrl.u32 %v353, 7
        %v355 = vsub.s32 %v352, %v354
        %v356 = vrot.slane %v349, %v355
        %v358 = vunpack.c.l.s4 1966171168
        %v359 = vunpack.c.0.s8 %v358
        %v360 = vlaneseq
        %v361 = vshrl.u32 %v360, 7
        %v362 = vsub.s32 %v359, %v361
        %v363 = vrot.slane %v356, %v362
        %364 = vrot.lane.b32.xlu0 %v363, 51
        %v365 = vpop.permute.xlu0 %364
        %v366 = vrot.slane %v365, 7
        %vm367 = vcmask 416768
        %v368 = vsel %vm367, %v366, %v365
        %vm370 = vcmp.lt.s32.totalorder %v301, 307
        %vm371 = vmand %vm307, %vm370
        %372 = vst.msk [vmem:[#allocation2] sm:$0x7] %vm371, %v368
        %v375 = vcombine.low %v345, %v346
        %v377 = vunpack.c.l.s4 1966171168
        %v378 = vunpack.c.0.s8 %v377
        %v379 = vlaneseq
        %v380 = vshrl.u32 %v379, 7
        %v381 = vsub.s32 %v378, %v380
        %v382 = vrot.slane %v375, %v381
        %v384 = vunpack.c.l.s4 1966171168
        %v385 = vunpack.c.0.s8 %v384
        %v386 = vlaneseq
        %v387 = vshrl.u32 %v386, 7
        %v388 = vsub.s32 %v385, %v387
        %v389 = vrot.slane %v382, %v388
        %390 = vrot.lane.b32.xlu0 %v389, 51
        %v391 = vpop.permute.xlu0 %390
        %v392 = vrot.slane %v391, 7
        %v393 = vsel %vm367, %v392, %v391
        %s395 = scalar_lea.vmem [#allocation2], 3
        %396 = vst.msk [vmem:[%s395] sm:$0x7] %vm371, %v393
        %v397 = vlaneseq
        %v398 = vand.u32 %v397, 127
        %v399 = vadd.s32 %v398, 128
        %vm400 = vcmp.lt.s32.totalorder %v398, 0
        %v401 = vsub.s32 0, %v398
        %v402 = vsel %vm400, %v401, %v398
        %v403 = vshrl.u32 %v402, 4
        %v404 = vand.u32 %v402, 15
        %v405 = vsub.s32 0, %v404
        %v406 = vsel %vm400, %v405, %v404
        %vm407 = vcmp.lt.s32.totalorder %v399, 0
        %v408 = vsub.s32 0, %v399
        %v409 = vsel %vm407, %v408, %v399
        %v410 = vshrl.u32 %v409, 4
        %v411 = vand.u32 %v409, 15
        %v412 = vsub.s32 0, %v411
        %v413 = vsel %vm407, %v412, %v411
        %vm414 = vcmp.ne.s32.totalorder %v406, 0
        %vm415 = vcmp.ne.s32.totalorder %v413, 0
        %vm416 = vcmp.lt.s32.totalorder %v406, 0
        %vm417 = vcmp.lt.s32.totalorder %v413, 0
        %vm418 = vmand %vm416, %vm414
        %vm419 = vmand %vm417, %vm415
        %v420 = vadd.s32 %v406, 16
        %v421 = vadd.s32 %v413, 16
        %v422 = vsel %vm418, %v420, %v406
        %v423 = vsel %vm419, %v421, %v413
        %v424 = vstv %s300
        %v425 = vld [vmem:[#allocation2] sm:$0x3]
        %v426 = vstv %s202
        %v427 = vmul.f32 %v426, %v425
        %v428 = vld [vmem:[#allocation2] sm:$0x7]
        %v429 = vstv %s209
        %v430 = vmul.f32 %v429, %v428
        %432 = vrot.lane.b32.xlu0 %v430, 112
        %v433 = vpop.permute.xlu0 %432
        %v434 = vrot.slane %v433, 1
        %vm435 = vcmask 916480
        %v436 = vsel %vm435, %v433, %v434
        %v438 = vadd.f32 %v427, %v436
        %v439 = vstv %s216
        %v440 = vmul.f32 %v439, %v428
        %442 = vrot.lane.b32.xlu0 %v440, 96
        %v443 = vpop.permute.xlu0 %442
        %v444 = vrot.slane %v443, 1
        %vm445 = vcmask 785408
        %v446 = vsel %vm445, %v443, %v444
        %v448 = vadd.f32 %v438, %v446
        %v449 = vstv %s223
        %v450 = vmul.f32 %v449, %v428
        %452 = vrot.lane.b32.xlu0 %v450, 80
        %v453 = vpop.permute.xlu0 %452
        %v454 = vrot.slane %v453, 1
        %vm455 = vcmask 654336
        %v456 = vsel %vm455, %v453, %v454
        %v458 = vadd.f32 %v448, %v456
        %v459 = vstv %s230
        %v460 = vmul.f32 %v459, %v428
        %462 = vrot.lane.b32.xlu0 %v460, 64
        %v463 = vpop.permute.xlu0 %462
        %v464 = vrot.slane %v463, 1
        %vm465 = vcmask 523264
        %v466 = vsel %vm465, %v463, %v464
        %v468 = vadd.f32 %v458, %v466
        %v469 = vstv %s237
        %v470 = vmul.f32 %v469, %v428
        %472 = vrot.lane.b32.xlu0 %v470, 48
        %v473 = vpop.permute.xlu0 %472
        %v474 = vrot.slane %v473, 1
        %vm475 = vcmask 392192
        %v476 = vsel %vm475, %v473, %v474
        %v478 = vadd.f32 %v468, %v476
        %v479 = vstv %s244
        %v480 = vmul.f32 %v479, %v428
        %482 = vrot.lane.b32.xlu0 %v480, 32
        %v483 = vpop.permute.xlu0 %482
        %v484 = vrot.slane %v483, 1
        %vm485 = vcmask 261120
        %v486 = vsel %vm485, %v483, %v484
        %v488 = vadd.f32 %v478, %v486
        %vm489 = vcmp.ge.s32.totalorder %v422, 3
        %vm490 = vcmp.ge.s32.totalorder %v423, 3
        %vm491 = vcmp.lt.s32.totalorder %v422, 19
        %vm492 = vcmp.lt.s32.totalorder %v423, 19
        %vm493 = vmand %vm489, %vm491
        %vm494 = vmand %vm490, %vm492
        %v496 = vlaneseq
        %v497 = vshrl.u32 %v496, 7
        %v498 = vsub.s32 0, %v497
        %v499 = vrot.slane %v488, %v498
        %v500 = vlaneseq
        %v501 = vshrl.u32 %v500, 7
        %v502 = vsub.s32 1, %v501
        %v503 = vrot.slane %v488, %v502
        %v506 = vsel %vm493, %v499, 0.0
        %v507 = vsel %vm494, %v503, 0.0
        %v508 = vadd.f32 %v424, %v506
        %v509 = vadd.f32 %v424, %v507
        %v510 = vstv %s203
        %v511 = vmul.f32 %v510, %v428
        %v512 = vstv %s210
        %v513 = vmul.f32 %v512, %v428
        %515 = vrot.lane.b32.xlu0 %v513, 112
        %v516 = vpop.permute.xlu0 %515
        %v517 = vrot.slane %v516, 1
        %v518 = vsel %vm435, %v516, %v517
        %v520 = vadd.f32 %v511, %v518
        %v521 = vstv %s217
        %v522 = vmul.f32 %v521, %v428
        %524 = vrot.lane.b32.xlu0 %v522, 96
        %v525 = vpop.permute.xlu0 %524
        %v526 = vrot.slane %v525, 1
        %v527 = vsel %vm445, %v525, %v526
        %v529 = vadd.f32 %v520, %v527
        %v530 = vstv %s224
        %v531 = vmul.f32 %v530, %v428
        %533 = vrot.lane.b32.xlu0 %v531, 80
        %v534 = vpop.permute.xlu0 %533
        %v535 = vrot.slane %v534, 1
        %v536 = vsel %vm455, %v534, %v535
        %v538 = vadd.f32 %v529, %v536
        %v539 = vstv %s231
        %v540 = vmul.f32 %v539, %v428
        %542 = vrot.lane.b32.xlu0 %v540, 64
        %v543 = vpop.permute.xlu0 %542
        %v544 = vrot.slane %v543, 1
        %v545 = vsel %vm465, %v543, %v544
        %v547 = vadd.f32 %v538, %v545
        %v548 = vstv %s238
        %v549 = vmul.f32 %v548, %v428
        %551 = vrot.lane.b32.xlu0 %v549, 48
        %v552 = vpop.permute.xlu0 %551
        %v553 = vrot.slane %v552, 1
        %v554 = vsel %vm475, %v552, %v553
        %v556 = vadd.f32 %v547, %v554
        %v557 = vstv %s245
        %v558 = vmul.f32 %v557, %v428
        %560 = vrot.lane.b32.xlu0 %v558, 32
        %v561 = vpop.permute.xlu0 %560
        %v562 = vrot.slane %v561, 1
        %v563 = vsel %vm485, %v561, %v562
        %v565 = vadd.f32 %v556, %v563
        %vm566 = vcmp.ge.s32.totalorder %v422, 2
        %vm567 = vcmp.ge.s32.totalorder %v423, 2
        %vm568 = vcmp.lt.s32.totalorder %v422, 18
        %vm569 = vcmp.lt.s32.totalorder %v423, 18
        %vm570 = vmand %vm566, %vm568
        %vm571 = vmand %vm567, %vm569
        %v573 = vlaneseq
        %v574 = vshrl.u32 %v573, 7
        %v575 = vsub.s32 0, %v574
        %v576 = vrot.slane %v565, %v575
        %v577 = vlaneseq
        %v578 = vshrl.u32 %v577, 7
        %v579 = vsub.s32 1, %v578
        %v580 = vrot.slane %v565, %v579
        %v581 = vlaneseq
        %v582 = vshrl.u32 %v581, 7
        %v583 = vsub.s32 2, %v582
        %v584 = vrot.slane %v565, %v583
        %585 = vrot.lane.b32.xlu0 %v576, 127
        %v586 = vpop.permute.xlu0 %585
        %587 = vrot.lane.b32.xlu0 %v580, 127
        %v588 = vpop.permute.xlu0 %587
        %589 = vrot.lane.b32.xlu0 %v584, 127
        %v590 = vpop.permute.xlu0 %589
        %vm591 = vcmask 1039360
        %v592 = vsel %vm591, %v586, %v588
        %v593 = vsel %vm591, %v588, %v590
        %v596 = vsel %vm570, %v592, 0.0
        %v597 = vsel %vm571, %v593, 0.0
        %v598 = vadd.f32 %v508, %v596
        %v599 = vadd.f32 %v509, %v597
        %v600 = vstv %s204
        %v601 = vmul.f32 %v600, %v428
        %v602 = vstv %s211
        %v603 = vmul.f32 %v602, %v428
        %605 = vrot.lane.b32.xlu0 %v603, 112
        %v606 = vpop.permute.xlu0 %605
        %v607 = vrot.slane %v606, 1
        %v608 = vsel %vm435, %v606, %v607
        %v610 = vadd.f32 %v601, %v608
        %v611 = vstv %s218
        %v612 = vmul.f32 %v611, %v428
        %614 = vrot.lane.b32.xlu0 %v612, 96
        %v615 = vpop.permute.xlu0 %614
        %v616 = vrot.slane %v615, 1
        %v617 = vsel %vm445, %v615, %v616
        %v619 = vadd.f32 %v610, %v617
        %v620 = vstv %s225
        %v621 = vmul.f32 %v620, %v428
        %623 = vrot.lane.b32.xlu0 %v621, 80
        %v624 = vpop.permute.xlu0 %623
        %v625 = vrot.slane %v624, 1
        %v626 = vsel %vm455, %v624, %v625
        %v628 = vadd.f32 %v619, %v626
        %v629 = vstv %s232
        %v630 = vmul.f32 %v629, %v428
        %632 = vrot.lane.b32.xlu0 %v630, 64
        %v633 = vpop.permute.xlu0 %632
        %v634 = vrot.slane %v633, 1
        %v635 = vsel %vm465, %v633, %v634
        %v637 = vadd.f32 %v628, %v635
        %v638 = vstv %s239
        %v639 = vmul.f32 %v638, %v428
        %641 = vrot.lane.b32.xlu0 %v639, 48
        %v642 = vpop.permute.xlu0 %641
        %v643 = vrot.slane %v642, 1
        %v644 = vsel %vm475, %v642, %v643
        %v646 = vadd.f32 %v637, %v644
        %v647 = vstv %s246
        %v648 = vmul.f32 %v647, %v428
        %650 = vrot.lane.b32.xlu0 %v648, 32
        %v651 = vpop.permute.xlu0 %650
        %v652 = vrot.slane %v651, 1
        %v653 = vsel %vm485, %v651, %v652
        %v655 = vadd.f32 %v646, %v653
        %vm656 = vcmp.ge.s32.totalorder %v422, 1
        %vm657 = vcmp.ge.s32.totalorder %v423, 1
        %vm658 = vcmp.lt.s32.totalorder %v422, 17
        %vm659 = vcmp.lt.s32.totalorder %v423, 17
        %vm660 = vmand %vm656, %vm658
        %vm661 = vmand %vm657, %vm659
        %v663 = vlaneseq
        %v664 = vshrl.u32 %v663, 7
        %v665 = vsub.s32 0, %v664
        %v666 = vrot.slane %v655, %v665
        %v667 = vlaneseq
        %v668 = vshrl.u32 %v667, 7
        %v669 = vsub.s32 1, %v668
        %v670 = vrot.slane %v655, %v669
        %v671 = vlaneseq
        %v672 = vshrl.u32 %v671, 7
        %v673 = vsub.s32 2, %v672
        %v674 = vrot.slane %v655, %v673
        %675 = vrot.lane.b32.xlu0 %v666, 126
        %v676 = vpop.permute.xlu0 %675
        %677 = vrot.lane.b32.xlu0 %v670, 126
        %v678 = vpop.permute.xlu0 %677
        %679 = vrot.lane.b32.xlu0 %v674, 126
        %v680 = vpop.permute.xlu0 %679
        %vm681 = vcmask 1031168
        %v682 = vsel %vm681, %v676, %v678
        %v683 = vsel %vm681, %v678, %v680
        %v686 = vsel %vm660, %v682, 0.0
        %v687 = vsel %vm661, %v683, 0.0
        %v688 = vadd.f32 %v598, %v686
        %v689 = vadd.f32 %v599, %v687
        %v690 = vstv %s205
        %v691 = vmul.f32 %v690, %v428
        %v692 = vstv %s212
        %v693 = vmul.f32 %v692, %v428
        %695 = vrot.lane.b32.xlu0 %v693, 112
        %v696 = vpop.permute.xlu0 %695
        %v697 = vrot.slane %v696, 1
        %v698 = vsel %vm435, %v696, %v697
        %v700 = vadd.f32 %v691, %v698
        %v701 = vstv %s219
        %v702 = vmul.f32 %v701, %v428
        %704 = vrot.lane.b32.xlu0 %v702, 96
        %v705 = vpop.permute.xlu0 %704
        %v706 = vrot.slane %v705, 1
        %v707 = vsel %vm445, %v705, %v706
        %v709 = vadd.f32 %v700, %v707
        %v710 = vstv %s226
        %v711 = vmul.f32 %v710, %v428
        %713 = vrot.lane.b32.xlu0 %v711, 80
        %v714 = vpop.permute.xlu0 %713
        %v715 = vrot.slane %v714, 1
        %v716 = vsel %vm455, %v714, %v715
        %v718 = vadd.f32 %v709, %v716
        %v719 = vstv %s233
        %v720 = vmul.f32 %v719, %v428
        %722 = vrot.lane.b32.xlu0 %v720, 64
        %v723 = vpop.permute.xlu0 %722
        %v724 = vrot.slane %v723, 1
        %v725 = vsel %vm465, %v723, %v724
        %v727 = vadd.f32 %v718, %v725
        %v728 = vstv %s240
        %v729 = vmul.f32 %v728, %v428
        %731 = vrot.lane.b32.xlu0 %v729, 48
        %v732 = vpop.permute.xlu0 %731
        %v733 = vrot.slane %v732, 1
        %v734 = vsel %vm475, %v732, %v733
        %v736 = vadd.f32 %v727, %v734
        %v737 = vstv %s247
        %v738 = vmul.f32 %v737, %v428
        %740 = vrot.lane.b32.xlu0 %v738, 32
        %v741 = vpop.permute.xlu0 %740
        %v742 = vrot.slane %v741, 1
        %v743 = vsel %vm485, %v741, %v742
        %v745 = vadd.f32 %v736, %v743
        %v747 = vlaneseq
        %v748 = vshrl.u32 %v747, 7
        %v749 = vsub.s32 0, %v748
        %v750 = vrot.slane %v745, %v749
        %v751 = vlaneseq
        %v752 = vshrl.u32 %v751, 7
        %v753 = vsub.s32 1, %v752
        %v754 = vrot.slane %v745, %v753
        %v755 = vlaneseq
        %v756 = vshrl.u32 %v755, 7
        %v757 = vsub.s32 2, %v756
        %v758 = vrot.slane %v745, %v757
        %759 = vrot.lane.b32.xlu0 %v750, 125
        %v760 = vpop.permute.xlu0 %759
        %761 = vrot.lane.b32.xlu0 %v754, 125
        %v762 = vpop.permute.xlu0 %761
        %763 = vrot.lane.b32.xlu0 %v758, 125
        %v764 = vpop.permute.xlu0 %763
        %vm765 = vcmask 1022976
        %v766 = vsel %vm765, %v760, %v762
        %v767 = vsel %vm765, %v762, %v764
        %v770 = vadd.f32 %v688, %v766
        %v771 = vadd.f32 %v689, %v767
        %v772 = vstv %s206
        %v773 = vmul.f32 %v772, %v428
        %v774 = vstv %s213
        %v775 = vmul.f32 %v774, %v428
        %777 = vrot.lane.b32.xlu0 %v775, 112
        %v778 = vpop.permute.xlu0 %777
        %v779 = vrot.slane %v778, 1
        %v780 = vsel %vm435, %v778, %v779
        %v782 = vadd.f32 %v773, %v780
        %v783 = vstv %s220
        %v784 = vmul.f32 %v783, %v428
        %786 = vrot.lane.b32.xlu0 %v784, 96
        %v787 = vpop.permute.xlu0 %786
        %v788 = vrot.slane %v787, 1
        %v789 = vsel %vm445, %v787, %v788
        %v791 = vadd.f32 %v782, %v789
        %v792 = vstv %s227
        %v793 = vmul.f32 %v792, %v428
        %795 = vrot.lane.b32.xlu0 %v793, 80
        %v796 = vpop.permute.xlu0 %795
        %v797 = vrot.slane %v796, 1
        %v798 = vsel %vm455, %v796, %v797
        %v800 = vadd.f32 %v791, %v798
        %v801 = vstv %s234
        %v802 = vmul.f32 %v801, %v428
        %804 = vrot.lane.b32.xlu0 %v802, 64
        %v805 = vpop.permute.xlu0 %804
        %v806 = vrot.slane %v805, 1
        %v807 = vsel %vm465, %v805, %v806
        %v809 = vadd.f32 %v800, %v807
        %v810 = vstv %s241
        %v811 = vmul.f32 %v810, %v428
        %813 = vrot.lane.b32.xlu0 %v811, 48
        %v814 = vpop.permute.xlu0 %813
        %v815 = vrot.slane %v814, 1
        %v816 = vsel %vm475, %v814, %v815
        %v818 = vadd.f32 %v809, %v816
        %v819 = vstv %s248
        %v820 = vmul.f32 %v819, %v428
        %822 = vrot.lane.b32.xlu0 %v820, 32
        %v823 = vpop.permute.xlu0 %822
        %v824 = vrot.slane %v823, 1
        %v825 = vsel %vm485, %v823, %v824
        %v827 = vadd.f32 %v818, %v825
        %vm828 = vcmp.ge.s32.totalorder %v422, 4294967295
        %vm829 = vcmp.ge.s32.totalorder %v423, 4294967295
        %vm830 = vcmp.lt.s32.totalorder %v422, 15
        %vm831 = vcmp.lt.s32.totalorder %v423, 15
        %vm832 = vmand %vm828, %vm830
        %vm833 = vmand %vm829, %vm831
        %v835 = vlaneseq
        %v836 = vshrl.u32 %v835, 7
        %v837 = vsub.s32 0, %v836
        %v838 = vrot.slane %v827, %v837
        %v839 = vlaneseq
        %v840 = vshrl.u32 %v839, 7
        %v841 = vsub.s32 1, %v840
        %v842 = vrot.slane %v827, %v841
        %v843 = vlaneseq
        %v844 = vshrl.u32 %v843, 7
        %v845 = vsub.s32 2, %v844
        %v846 = vrot.slane %v827, %v845
        %847 = vrot.lane.b32.xlu0 %v838, 124
        %v848 = vpop.permute.xlu0 %847
        %849 = vrot.lane.b32.xlu0 %v842, 124
        %v850 = vpop.permute.xlu0 %849
        %851 = vrot.lane.b32.xlu0 %v846, 124
        %v852 = vpop.permute.xlu0 %851
        %vm853 = vcmask 1014784
        %v854 = vsel %vm853, %v848, %v850
        %v855 = vsel %vm853, %v850, %v852
        %v858 = vsel %vm832, %v854, 0.0
        %v859 = vsel %vm833, %v855, 0.0
        %v860 = vadd.f32 %v770, %v858
        %v861 = vadd.f32 %v771, %v859
        %v862 = vstv %s207
        %v863 = vmul.f32 %v862, %v428
        %v864 = vstv %s214
        %v865 = vmul.f32 %v864, %v428
        %867 = vrot.lane.b32.xlu0 %v865, 112
        %v868 = vpop.permute.xlu0 %867
        %v869 = vrot.slane %v868, 1
        %v870 = vsel %vm435, %v868, %v869
        %v872 = vadd.f32 %v863, %v870
        %v873 = vstv %s221
        %v874 = vmul.f32 %v873, %v428
        %876 = vrot.lane.b32.xlu0 %v874, 96
        %v877 = vpop.permute.xlu0 %876
        %v878 = vrot.slane %v877, 1
        %v879 = vsel %vm445, %v877, %v878
        %v881 = vadd.f32 %v872, %v879
        %v882 = vstv %s228
        %v883 = vmul.f32 %v882, %v428
        %885 = vrot.lane.b32.xlu0 %v883, 80
        %v886 = vpop.permute.xlu0 %885
        %v887 = vrot.slane %v886, 1
        %v888 = vsel %vm455, %v886, %v887
        %v890 = vadd.f32 %v881, %v888
        %v891 = vstv %s235
        %v892 = vmul.f32 %v891, %v428
        %894 = vrot.lane.b32.xlu0 %v892, 64
        %v895 = vpop.permute.xlu0 %894
        %v896 = vrot.slane %v895, 1
        %v897 = vsel %vm465, %v895, %v896
        %v899 = vadd.f32 %v890, %v897
        %v900 = vstv %s242
        %v901 = vmul.f32 %v900, %v428
        %903 = vrot.lane.b32.xlu0 %v901, 48
        %v904 = vpop.permute.xlu0 %903
        %v905 = vrot.slane %v904, 1
        %v906 = vsel %vm475, %v904, %v905
        %v908 = vadd.f32 %v899, %v906
        %v909 = vstv %s249
        %v910 = vmul.f32 %v909, %v428
        %912 = vrot.lane.b32.xlu0 %v910, 32
        %v913 = vpop.permute.xlu0 %912
        %v914 = vrot.slane %v913, 1
        %v915 = vsel %vm485, %v913, %v914
        %v917 = vadd.f32 %v908, %v915
        %vm918 = vcmp.ge.s32.totalorder %v422, 4294967294
        %vm919 = vcmp.ge.s32.totalorder %v423, 4294967294
        %vm920 = vcmp.lt.s32.totalorder %v422, 14
        %vm921 = vcmp.lt.s32.totalorder %v423, 14
        %vm922 = vmand %vm918, %vm920
        %vm923 = vmand %vm919, %vm921
        %v925 = vlaneseq
        %v926 = vshrl.u32 %v925, 7
        %v927 = vsub.s32 0, %v926
        %v928 = vrot.slane %v917, %v927
        %v929 = vlaneseq
        %v930 = vshrl.u32 %v929, 7
        %v931 = vsub.s32 1, %v930
        %v932 = vrot.slane %v917, %v931
        %v933 = vlaneseq
        %v934 = vshrl.u32 %v933, 7
        %v935 = vsub.s32 2, %v934
        %v936 = vrot.slane %v917, %v935
        %937 = vrot.lane.b32.xlu0 %v928, 123
        %v938 = vpop.permute.xlu0 %937
        %939 = vrot.lane.b32.xlu0 %v932, 123
        %v940 = vpop.permute.xlu0 %939
        %941 = vrot.lane.b32.xlu0 %v936, 123
        %v942 = vpop.permute.xlu0 %941
        %vm943 = vcmask 1006592
        %v944 = vsel %vm943, %v938, %v940
        %v945 = vsel %vm943, %v940, %v942
        %v948 = vsel %vm922, %v944, 0.0
        %v949 = vsel %vm923, %v945, 0.0
        %v950 = vadd.f32 %v860, %v948
        %v951 = vadd.f32 %v861, %v949
        %v952 = vstv %s208
        %v953 = vmul.f32 %v952, %v428
        %v954 = vstv %s215
        %v955 = vmul.f32 %v954, %v428
        %957 = vrot.lane.b32.xlu0 %v955, 112
        %v958 = vpop.permute.xlu0 %957
        %v959 = vrot.slane %v958, 1
        %v960 = vsel %vm435, %v958, %v959
        %v962 = vadd.f32 %v953, %v960
        %v963 = vstv %s222
        %v964 = vmul.f32 %v963, %v428
        %966 = vrot.lane.b32.xlu0 %v964, 96
        %v967 = vpop.permute.xlu0 %966
        %v968 = vrot.slane %v967, 1
        %v969 = vsel %vm445, %v967, %v968
        %v971 = vadd.f32 %v962, %v969
        %v972 = vstv %s229
        %v973 = vmul.f32 %v972, %v428
        %975 = vrot.lane.b32.xlu0 %v973, 80
        %v976 = vpop.permute.xlu0 %975
        %v977 = vrot.slane %v976, 1
        %v978 = vsel %vm455, %v976, %v977
        %v980 = vadd.f32 %v971, %v978
        %v981 = vstv %s236
        %v982 = vmul.f32 %v981, %v428
        %984 = vrot.lane.b32.xlu0 %v982, 64
        %v985 = vpop.permute.xlu0 %984
        %v986 = vrot.slane %v985, 1
        %v987 = vsel %vm465, %v985, %v986
        %v989 = vadd.f32 %v980, %v987
        %v990 = vstv %s243
        %v991 = vmul.f32 %v990, %v428
        %993 = vrot.lane.b32.xlu0 %v991, 48
        %v994 = vpop.permute.xlu0 %993
        %v995 = vrot.slane %v994, 1
        %v996 = vsel %vm475, %v994, %v995
        %v998 = vadd.f32 %v989, %v996
        %v999 = vstv %s250
        %v1000 = vmul.f32 %v999, %v428
        %1002 = vrot.lane.b32.xlu0 %v1000, 32
        %v1003 = vpop.permute.xlu0 %1002
        %v1004 = vrot.slane %v1003, 1
        %v1005 = vsel %vm485, %v1003, %v1004
        %v1007 = vadd.f32 %v998, %v1005
        %vm1008 = vcmp.ge.s32.totalorder %v422, 4294967293
        %vm1009 = vcmp.ge.s32.totalorder %v423, 4294967293
        %vm1010 = vcmp.lt.s32.totalorder %v422, 13
        %vm1011 = vcmp.lt.s32.totalorder %v423, 13
        %vm1012 = vmand %vm1008, %vm1010
        %vm1013 = vmand %vm1009, %vm1011
        %v1015 = vlaneseq
        %v1016 = vshrl.u32 %v1015, 7
        %v1017 = vsub.s32 0, %v1016
        %v1018 = vrot.slane %v1007, %v1017
        %v1019 = vlaneseq
        %v1020 = vshrl.u32 %v1019, 7
        %v1021 = vsub.s32 1, %v1020
        %v1022 = vrot.slane %v1007, %v1021
        %v1023 = vlaneseq
        %v1024 = vshrl.u32 %v1023, 7
        %v1025 = vsub.s32 2, %v1024
        %v1026 = vrot.slane %v1007, %v1025
        %1027 = vrot.lane.b32.xlu0 %v1018, 122
        %v1028 = vpop.permute.xlu0 %1027
        %1029 = vrot.lane.b32.xlu0 %v1022, 122
        %v1030 = vpop.permute.xlu0 %1029
        %1031 = vrot.lane.b32.xlu0 %v1026, 122
        %v1032 = vpop.permute.xlu0 %1031
        %vm1033 = vcmask 998400
        %v1034 = vsel %vm1033, %v1028, %v1030
        %v1035 = vsel %vm1033, %v1030, %v1032
        %v1038 = vsel %vm1012, %v1034, 0.0
        %v1039 = vsel %vm1013, %v1035, 0.0
        %v1040 = vadd.f32 %v950, %v1038
        %v1041 = vadd.f32 %v951, %v1039
        %v1042 = vld [vmem:[%s395] sm:$0x3]
        %v1043 = vstv %s251
        %v1044 = vmul.f32 %v1043, %v1042
        %v1045 = vld [vmem:[%s395] sm:$0x7]
        %v1046 = vstv %s258
        %v1047 = vmul.f32 %v1046, %v1045
        %1049 = vrot.lane.b32.xlu0 %v1047, 112
        %v1050 = vpop.permute.xlu0 %1049
        %v1051 = vrot.slane %v1050, 1
        %v1052 = vsel %vm435, %v1050, %v1051
        %v1054 = vadd.f32 %v1044, %v1052
        %v1055 = vstv %s265
        %v1056 = vmul.f32 %v1055, %v1045
        %1058 = vrot.lane.b32.xlu0 %v1056, 96
        %v1059 = vpop.permute.xlu0 %1058
        %v1060 = vrot.slane %v1059, 1
        %v1061 = vsel %vm445, %v1059, %v1060
        %v1063 = vadd.f32 %v1054, %v1061
        %v1064 = vstv %s272
        %v1065 = vmul.f32 %v1064, %v1045
        %1067 = vrot.lane.b32.xlu0 %v1065, 80
        %v1068 = vpop.permute.xlu0 %1067
        %v1069 = vrot.slane %v1068, 1
        %v1070 = vsel %vm455, %v1068, %v1069
        %v1072 = vadd.f32 %v1063, %v1070
        %v1073 = vstv %s279
        %v1074 = vmul.f32 %v1073, %v1045
        %1076 = vrot.lane.b32.xlu0 %v1074, 64
        %v1077 = vpop.permute.xlu0 %1076
        %v1078 = vrot.slane %v1077, 1
        %v1079 = vsel %vm465, %v1077, %v1078
        %v1081 = vadd.f32 %v1072, %v1079
        %v1082 = vstv %s286
        %v1083 = vmul.f32 %v1082, %v1045
        %1085 = vrot.lane.b32.xlu0 %v1083, 48
        %v1086 = vpop.permute.xlu0 %1085
        %v1087 = vrot.slane %v1086, 1
        %v1088 = vsel %vm475, %v1086, %v1087
        %v1090 = vadd.f32 %v1081, %v1088
        %v1091 = vstv %s293
        %v1092 = vmul.f32 %v1091, %v1045
        %1094 = vrot.lane.b32.xlu0 %v1092, 32
        %v1095 = vpop.permute.xlu0 %1094
        %v1096 = vrot.slane %v1095, 1
        %v1097 = vsel %vm485, %v1095, %v1096
        %v1099 = vadd.f32 %v1090, %v1097
        %v1101 = vlaneseq
        %v1102 = vshrl.u32 %v1101, 7
        %v1103 = vsub.s32 0, %v1102
        %v1104 = vrot.slane %v1099, %v1103
        %v1105 = vlaneseq
        %v1106 = vshrl.u32 %v1105, 7
        %v1107 = vsub.s32 1, %v1106
        %v1108 = vrot.slane %v1099, %v1107
        %v1111 = vsel %vm493, %v1104, 0.0
        %v1112 = vsel %vm494, %v1108, 0.0
        %v1113 = vadd.f32 %v1040, %v1111
        %v1114 = vadd.f32 %v1041, %v1112
        %v1115 = vstv %s252
        %v1116 = vmul.f32 %v1115, %v1045
        %v1117 = vstv %s259
        %v1118 = vmul.f32 %v1117, %v1045
        %1120 = vrot.lane.b32.xlu0 %v1118, 112
        %v1121 = vpop.permute.xlu0 %1120
        %v1122 = vrot.slane %v1121, 1
        %v1123 = vsel %vm435, %v1121, %v1122
        %v1125 = vadd.f32 %v1116, %v1123
        %v1126 = vstv %s266
        %v1127 = vmul.f32 %v1126, %v1045
        %1129 = vrot.lane.b32.xlu0 %v1127, 96
        %v1130 = vpop.permute.xlu0 %1129
        %v1131 = vrot.slane %v1130, 1
        %v1132 = vsel %vm445, %v1130, %v1131
        %v1134 = vadd.f32 %v1125, %v1132
        %v1135 = vstv %s273
        %v1136 = vmul.f32 %v1135, %v1045
        %1138 = vrot.lane.b32.xlu0 %v1136, 80
        %v1139 = vpop.permute.xlu0 %1138
        %v1140 = vrot.slane %v1139, 1
        %v1141 = vsel %vm455, %v1139, %v1140
        %v1143 = vadd.f32 %v1134, %v1141
        %v1144 = vstv %s280
        %v1145 = vmul.f32 %v1144, %v1045
        %1147 = vrot.lane.b32.xlu0 %v1145, 64
        %v1148 = vpop.permute.xlu0 %1147
        %v1149 = vrot.slane %v1148, 1
        %v1150 = vsel %vm465, %v1148, %v1149
        %v1152 = vadd.f32 %v1143, %v1150
        %v1153 = vstv %s287
        %v1154 = vmul.f32 %v1153, %v1045
        %1156 = vrot.lane.b32.xlu0 %v1154, 48
        %v1157 = vpop.permute.xlu0 %1156
        %v1158 = vrot.slane %v1157, 1
        %v1159 = vsel %vm475, %v1157, %v1158
        %v1161 = vadd.f32 %v1152, %v1159
        %v1162 = vstv %s294
        %v1163 = vmul.f32 %v1162, %v1045
        %1165 = vrot.lane.b32.xlu0 %v1163, 32
        %v1166 = vpop.permute.xlu0 %1165
        %v1167 = vrot.slane %v1166, 1
        %v1168 = vsel %vm485, %v1166, %v1167
        %v1170 = vadd.f32 %v1161, %v1168
        %v1172 = vlaneseq
        %v1173 = vshrl.u32 %v1172, 7
        %v1174 = vsub.s32 0, %v1173
        %v1175 = vrot.slane %v1170, %v1174
        %v1176 = vlaneseq
        %v1177 = vshrl.u32 %v1176, 7
        %v1178 = vsub.s32 1, %v1177
        %v1179 = vrot.slane %v1170, %v1178
        %v1180 = vlaneseq
        %v1181 = vshrl.u32 %v1180, 7
        %v1182 = vsub.s32 2, %v1181
        %v1183 = vrot.slane %v1170, %v1182
        %1184 = vrot.lane.b32.xlu0 %v1175, 127
        %v1185 = vpop.permute.xlu0 %1184
        %1186 = vrot.lane.b32.xlu0 %v1179, 127
        %v1187 = vpop.permute.xlu0 %1186
        %1188 = vrot.lane.b32.xlu0 %v1183, 127
        %v1189 = vpop.permute.xlu0 %1188
        %v1190 = vsel %vm591, %v1185, %v1187
        %v1191 = vsel %vm591, %v1187, %v1189
        %v1194 = vsel %vm570, %v1190, 0.0
        %v1195 = vsel %vm571, %v1191, 0.0
        %v1196 = vadd.f32 %v1113, %v1194
        %v1197 = vadd.f32 %v1114, %v1195
        %v1198 = vstv %s253
        %v1199 = vmul.f32 %v1198, %v1045
        %v1200 = vstv %s260
        %v1201 = vmul.f32 %v1200, %v1045
        %1203 = vrot.lane.b32.xlu0 %v1201, 112
        %v1204 = vpop.permute.xlu0 %1203
        %v1205 = vrot.slane %v1204, 1
        %v1206 = vsel %vm435, %v1204, %v1205
        %v1208 = vadd.f32 %v1199, %v1206
        %v1209 = vstv %s267
        %v1210 = vmul.f32 %v1209, %v1045
        %1212 = vrot.lane.b32.xlu0 %v1210, 96
        %v1213 = vpop.permute.xlu0 %1212
        %v1214 = vrot.slane %v1213, 1
        %v1215 = vsel %vm445, %v1213, %v1214
        %v1217 = vadd.f32 %v1208, %v1215
        %v1218 = vstv %s274
        %v1219 = vmul.f32 %v1218, %v1045
        %1221 = vrot.lane.b32.xlu0 %v1219, 80
        %v1222 = vpop.permute.xlu0 %1221
        %v1223 = vrot.slane %v1222, 1
        %v1224 = vsel %vm455, %v1222, %v1223
        %v1226 = vadd.f32 %v1217, %v1224
        %v1227 = vstv %s281
        %v1228 = vmul.f32 %v1227, %v1045
        %1230 = vrot.lane.b32.xlu0 %v1228, 64
        %v1231 = vpop.permute.xlu0 %1230
        %v1232 = vrot.slane %v1231, 1
        %v1233 = vsel %vm465, %v1231, %v1232
        %v1235 = vadd.f32 %v1226, %v1233
        %v1236 = vstv %s288
        %v1237 = vmul.f32 %v1236, %v1045
        %1239 = vrot.lane.b32.xlu0 %v1237, 48
        %v1240 = vpop.permute.xlu0 %1239
        %v1241 = vrot.slane %v1240, 1
        %v1242 = vsel %vm475, %v1240, %v1241
        %v1244 = vadd.f32 %v1235, %v1242
        %v1245 = vstv %s295
        %v1246 = vmul.f32 %v1245, %v1045
        %1248 = vrot.lane.b32.xlu0 %v1246, 32
        %v1249 = vpop.permute.xlu0 %1248
        %v1250 = vrot.slane %v1249, 1
        %v1251 = vsel %vm485, %v1249, %v1250
        %v1253 = vadd.f32 %v1244, %v1251
        %v1255 = vlaneseq
        %v1256 = vshrl.u32 %v1255, 7
        %v1257 = vsub.s32 0, %v1256
        %v1258 = vrot.slane %v1253, %v1257
        %v1259 = vlaneseq
        %v1260 = vshrl.u32 %v1259, 7
        %v1261 = vsub.s32 1, %v1260
        %v1262 = vrot.slane %v1253, %v1261
        %v1263 = vlaneseq
        %v1264 = vshrl.u32 %v1263, 7
        %v1265 = vsub.s32 2, %v1264
        %v1266 = vrot.slane %v1253, %v1265
        %1267 = vrot.lane.b32.xlu0 %v1258, 126
        %v1268 = vpop.permute.xlu0 %1267
        %1269 = vrot.lane.b32.xlu0 %v1262, 126
        %v1270 = vpop.permute.xlu0 %1269
        %1271 = vrot.lane.b32.xlu0 %v1266, 126
        %v1272 = vpop.permute.xlu0 %1271
        %v1273 = vsel %vm681, %v1268, %v1270
        %v1274 = vsel %vm681, %v1270, %v1272
        %v1277 = vsel %vm660, %v1273, 0.0
        %v1278 = vsel %vm661, %v1274, 0.0
        %v1279 = vadd.f32 %v1196, %v1277
        %v1280 = vadd.f32 %v1197, %v1278
        %v1281 = vstv %s254
        %v1282 = vmul.f32 %v1281, %v1045
        %v1283 = vstv %s261
        %v1284 = vmul.f32 %v1283, %v1045
        %1286 = vrot.lane.b32.xlu0 %v1284, 112
        %v1287 = vpop.permute.xlu0 %1286
        %v1288 = vrot.slane %v1287, 1
        %v1289 = vsel %vm435, %v1287, %v1288
        %v1291 = vadd.f32 %v1282, %v1289
        %v1292 = vstv %s268
        %v1293 = vmul.f32 %v1292, %v1045
        %1295 = vrot.lane.b32.xlu0 %v1293, 96
        %v1296 = vpop.permute.xlu0 %1295
        %v1297 = vrot.slane %v1296, 1
        %v1298 = vsel %vm445, %v1296, %v1297
        %v1300 = vadd.f32 %v1291, %v1298
        %v1301 = vstv %s275
        %v1302 = vmul.f32 %v1301, %v1045
        %1304 = vrot.lane.b32.xlu0 %v1302, 80
        %v1305 = vpop.permute.xlu0 %1304
        %v1306 = vrot.slane %v1305, 1
        %v1307 = vsel %vm455, %v1305, %v1306
        %v1309 = vadd.f32 %v1300, %v1307
        %v1310 = vstv %s282
        %v1311 = vmul.f32 %v1310, %v1045
        %1313 = vrot.lane.b32.xlu0 %v1311, 64
        %v1314 = vpop.permute.xlu0 %1313
        %v1315 = vrot.slane %v1314, 1
        %v1316 = vsel %vm465, %v1314, %v1315
        %v1318 = vadd.f32 %v1309, %v1316
        %v1319 = vstv %s289
        %v1320 = vmul.f32 %v1319, %v1045
        %1322 = vrot.lane.b32.xlu0 %v1320, 48
        %v1323 = vpop.permute.xlu0 %1322
        %v1324 = vrot.slane %v1323, 1
        %v1325 = vsel %vm475, %v1323, %v1324
        %v1327 = vadd.f32 %v1318, %v1325
        %v1328 = vstv %s296
        %v1329 = vmul.f32 %v1328, %v1045
        %1331 = vrot.lane.b32.xlu0 %v1329, 32
        %v1332 = vpop.permute.xlu0 %1331
        %v1333 = vrot.slane %v1332, 1
        %v1334 = vsel %vm485, %v1332, %v1333
        %v1336 = vadd.f32 %v1327, %v1334
        %v1338 = vlaneseq
        %v1339 = vshrl.u32 %v1338, 7
        %v1340 = vsub.s32 0, %v1339
        %v1341 = vrot.slane %v1336, %v1340
        %v1342 = vlaneseq
        %v1343 = vshrl.u32 %v1342, 7
        %v1344 = vsub.s32 1, %v1343
        %v1345 = vrot.slane %v1336, %v1344
        %v1346 = vlaneseq
        %v1347 = vshrl.u32 %v1346, 7
        %v1348 = vsub.s32 2, %v1347
        %v1349 = vrot.slane %v1336, %v1348
        %1350 = vrot.lane.b32.xlu0 %v1341, 125
        %v1351 = vpop.permute.xlu0 %1350
        %1352 = vrot.lane.b32.xlu0 %v1345, 125
        %v1353 = vpop.permute.xlu0 %1352
        %1354 = vrot.lane.b32.xlu0 %v1349, 125
        %v1355 = vpop.permute.xlu0 %1354
        %v1356 = vsel %vm765, %v1351, %v1353
        %v1357 = vsel %vm765, %v1353, %v1355
        %v1360 = vadd.f32 %v1279, %v1356
        %v1361 = vadd.f32 %v1280, %v1357
        %v1362 = vstv %s255
        %v1363 = vmul.f32 %v1362, %v1045
        %v1364 = vstv %s262
        %v1365 = vmul.f32 %v1364, %v1045
        %1367 = vrot.lane.b32.xlu0 %v1365, 112
        %v1368 = vpop.permute.xlu0 %1367
        %v1369 = vrot.slane %v1368, 1
        %v1370 = vsel %vm435, %v1368, %v1369
        %v1372 = vadd.f32 %v1363, %v1370
        %v1373 = vstv %s269
        %v1374 = vmul.f32 %v1373, %v1045
        %1376 = vrot.lane.b32.xlu0 %v1374, 96
        %v1377 = vpop.permute.xlu0 %1376
        %v1378 = vrot.slane %v1377, 1
        %v1379 = vsel %vm445, %v1377, %v1378
        %v1381 = vadd.f32 %v1372, %v1379
        %v1382 = vstv %s276
        %v1383 = vmul.f32 %v1382, %v1045
        %1385 = vrot.lane.b32.xlu0 %v1383, 80
        %v1386 = vpop.permute.xlu0 %1385
        %v1387 = vrot.slane %v1386, 1
        %v1388 = vsel %vm455, %v1386, %v1387
        %v1390 = vadd.f32 %v1381, %v1388
        %v1391 = vstv %s283
        %v1392 = vmul.f32 %v1391, %v1045
        %1394 = vrot.lane.b32.xlu0 %v1392, 64
        %v1395 = vpop.permute.xlu0 %1394
        %v1396 = vrot.slane %v1395, 1
        %v1397 = vsel %vm465, %v1395, %v1396
        %v1399 = vadd.f32 %v1390, %v1397
        %v1400 = vstv %s290
        %v1401 = vmul.f32 %v1400, %v1045
        %1403 = vrot.lane.b32.xlu0 %v1401, 48
        %v1404 = vpop.permute.xlu0 %1403
        %v1405 = vrot.slane %v1404, 1
        %v1406 = vsel %vm475, %v1404, %v1405
        %v1408 = vadd.f32 %v1399, %v1406
        %v1409 = vstv %s297
        %v1410 = vmul.f32 %v1409, %v1045
        %1412 = vrot.lane.b32.xlu0 %v1410, 32
        %v1413 = vpop.permute.xlu0 %1412
        %v1414 = vrot.slane %v1413, 1
        %v1415 = vsel %vm485, %v1413, %v1414
        %v1417 = vadd.f32 %v1408, %v1415
        %v1419 = vlaneseq
        %v1420 = vshrl.u32 %v1419, 7
        %v1421 = vsub.s32 0, %v1420
        %v1422 = vrot.slane %v1417, %v1421
        %v1423 = vlaneseq
        %v1424 = vshrl.u32 %v1423, 7
        %v1425 = vsub.s32 1, %v1424
        %v1426 = vrot.slane %v1417, %v1425
        %v1427 = vlaneseq
        %v1428 = vshrl.u32 %v1427, 7
        %v1429 = vsub.s32 2, %v1428
        %v1430 = vrot.slane %v1417, %v1429
        %1431 = vrot.lane.b32.xlu0 %v1422, 124
        %v1432 = vpop.permute.xlu0 %1431
        %1433 = vrot.lane.b32.xlu0 %v1426, 124
        %v1434 = vpop.permute.xlu0 %1433
        %1435 = vrot.lane.b32.xlu0 %v1430, 124
        %v1436 = vpop.permute.xlu0 %1435
        %v1437 = vsel %vm853, %v1432, %v1434
        %v1438 = vsel %vm853, %v1434, %v1436
        %v1441 = vsel %vm832, %v1437, 0.0
        %v1442 = vsel %vm833, %v1438, 0.0
        %v1443 = vadd.f32 %v1360, %v1441
        %v1444 = vadd.f32 %v1361, %v1442
        %v1445 = vstv %s256
        %v1446 = vmul.f32 %v1445, %v1045
        %v1447 = vstv %s263
        %v1448 = vmul.f32 %v1447, %v1045
        %1450 = vrot.lane.b32.xlu0 %v1448, 112
        %v1451 = vpop.permute.xlu0 %1450
        %v1452 = vrot.slane %v1451, 1
        %v1453 = vsel %vm435, %v1451, %v1452
        %v1455 = vadd.f32 %v1446, %v1453
        %v1456 = vstv %s270
        %v1457 = vmul.f32 %v1456, %v1045
        %1459 = vrot.lane.b32.xlu0 %v1457, 96
        %v1460 = vpop.permute.xlu0 %1459
        %v1461 = vrot.slane %v1460, 1
        %v1462 = vsel %vm445, %v1460, %v1461
        %v1464 = vadd.f32 %v1455, %v1462
        %v1465 = vstv %s277
        %v1466 = vmul.f32 %v1465, %v1045
        %1468 = vrot.lane.b32.xlu0 %v1466, 80
        %v1469 = vpop.permute.xlu0 %1468
        %v1470 = vrot.slane %v1469, 1
        %v1471 = vsel %vm455, %v1469, %v1470
        %v1473 = vadd.f32 %v1464, %v1471
        %v1474 = vstv %s284
        %v1475 = vmul.f32 %v1474, %v1045
        %1477 = vrot.lane.b32.xlu0 %v1475, 64
        %v1478 = vpop.permute.xlu0 %1477
        %v1479 = vrot.slane %v1478, 1
        %v1480 = vsel %vm465, %v1478, %v1479
        %v1482 = vadd.f32 %v1473, %v1480
        %v1483 = vstv %s291
        %v1484 = vmul.f32 %v1483, %v1045
        %1486 = vrot.lane.b32.xlu0 %v1484, 48
        %v1487 = vpop.permute.xlu0 %1486
        %v1488 = vrot.slane %v1487, 1
        %v1489 = vsel %vm475, %v1487, %v1488
        %v1491 = vadd.f32 %v1482, %v1489
        %v1492 = vstv %s298
        %v1493 = vmul.f32 %v1492, %v1045
        %1495 = vrot.lane.b32.xlu0 %v1493, 32
        %v1496 = vpop.permute.xlu0 %1495
        %v1497 = vrot.slane %v1496, 1
        %v1498 = vsel %vm485, %v1496, %v1497
        %v1500 = vadd.f32 %v1491, %v1498
        %v1502 = vlaneseq
        %v1503 = vshrl.u32 %v1502, 7
        %v1504 = vsub.s32 0, %v1503
        %v1505 = vrot.slane %v1500, %v1504
        %v1506 = vlaneseq
        %v1507 = vshrl.u32 %v1506, 7
        %v1508 = vsub.s32 1, %v1507
        %v1509 = vrot.slane %v1500, %v1508
        %v1510 = vlaneseq
        %v1511 = vshrl.u32 %v1510, 7
        %v1512 = vsub.s32 2, %v1511
        %v1513 = vrot.slane %v1500, %v1512
        %1514 = vrot.lane.b32.xlu0 %v1505, 123
        %v1515 = vpop.permute.xlu0 %1514
        %1516 = vrot.lane.b32.xlu0 %v1509, 123
        %v1517 = vpop.permute.xlu0 %1516
        %1518 = vrot.lane.b32.xlu0 %v1513, 123
        %v1519 = vpop.permute.xlu0 %1518
        %v1520 = vsel %vm943, %v1515, %v1517
        %v1521 = vsel %vm943, %v1517, %v1519
        %v1524 = vsel %vm922, %v1520, 0.0
        %v1525 = vsel %vm923, %v1521, 0.0
        %v1526 = vadd.f32 %v1443, %v1524
        %v1527 = vadd.f32 %v1444, %v1525
        %v1528 = vstv %s257
        %v1529 = vmul.f32 %v1528, %v1045
        %v1530 = vstv %s264
        %v1531 = vmul.f32 %v1530, %v1045
        %1533 = vrot.lane.b32.xlu0 %v1531, 112
        %v1534 = vpop.permute.xlu0 %1533
        %v1535 = vrot.slane %v1534, 1
        %v1536 = vsel %vm435, %v1534, %v1535
        %v1538 = vadd.f32 %v1529, %v1536
        %v1539 = vstv %s271
        %v1540 = vmul.f32 %v1539, %v1045
        %1542 = vrot.lane.b32.xlu0 %v1540, 96
        %v1543 = vpop.permute.xlu0 %1542
        %v1544 = vrot.slane %v1543, 1
        %v1545 = vsel %vm445, %v1543, %v1544
        %v1547 = vadd.f32 %v1538, %v1545
        %v1548 = vstv %s278
        %v1549 = vmul.f32 %v1548, %v1045
        %1551 = vrot.lane.b32.xlu0 %v1549, 80
        %v1552 = vpop.permute.xlu0 %1551
        %v1553 = vrot.slane %v1552, 1
        %v1554 = vsel %vm455, %v1552, %v1553
        %v1556 = vadd.f32 %v1547, %v1554
        %v1557 = vstv %s285
        %v1558 = vmul.f32 %v1557, %v1045
        %1560 = vrot.lane.b32.xlu0 %v1558, 64
        %v1561 = vpop.permute.xlu0 %1560
        %v1562 = vrot.slane %v1561, 1
        %v1563 = vsel %vm465, %v1561, %v1562
        %v1565 = vadd.f32 %v1556, %v1563
        %v1566 = vstv %s292
        %v1567 = vmul.f32 %v1566, %v1045
        %1569 = vrot.lane.b32.xlu0 %v1567, 48
        %v1570 = vpop.permute.xlu0 %1569
        %v1571 = vrot.slane %v1570, 1
        %v1572 = vsel %vm475, %v1570, %v1571
        %v1574 = vadd.f32 %v1565, %v1572
        %v1575 = vstv %s299
        %v1576 = vmul.f32 %v1575, %v1045
        %1578 = vrot.lane.b32.xlu0 %v1576, 32
        %v1579 = vpop.permute.xlu0 %1578
        %v1580 = vrot.slane %v1579, 1
        %v1581 = vsel %vm485, %v1579, %v1580
        %v1583 = vadd.f32 %v1574, %v1581
        %v1585 = vlaneseq
        %v1586 = vshrl.u32 %v1585, 7
        %v1587 = vsub.s32 0, %v1586
        %v1588 = vrot.slane %v1583, %v1587
        %v1589 = vlaneseq
        %v1590 = vshrl.u32 %v1589, 7
        %v1591 = vsub.s32 1, %v1590
        %v1592 = vrot.slane %v1583, %v1591
        %v1593 = vlaneseq
        %v1594 = vshrl.u32 %v1593, 7
        %v1595 = vsub.s32 2, %v1594
        %v1596 = vrot.slane %v1583, %v1595
        %1597 = vrot.lane.b32.xlu0 %v1588, 122
        %v1598 = vpop.permute.xlu0 %1597
        %1599 = vrot.lane.b32.xlu0 %v1592, 122
        %v1600 = vpop.permute.xlu0 %1599
        %1601 = vrot.lane.b32.xlu0 %v1596, 122
        %v1602 = vpop.permute.xlu0 %1601
        %v1603 = vsel %vm1033, %v1598, %v1600
        %v1604 = vsel %vm1033, %v1600, %v1602
        %v1607 = vsel %vm1012, %v1603, 0.0
        %v1608 = vsel %vm1013, %v1604, 0.0
        %v1609 = vadd.f32 %v1526, %v1607
        %v1610 = vadd.f32 %v1527, %v1608
        %v1611 = vxor.u32 %v1609, 2147483648
        %v1612 = vxor.u32 %v1610, 2147483648
        %v1613 = vmul.f32 %v1611, 1.442695
        %v1614 = vpow.pop %v1613
        %v1615 = vmul.f32 %v1612, 1.442695
        %v1616 = vpow.pop %v1615
        %v1617 = vadd.f32 %v1614, 1.0
        %v1618 = vadd.f32 %v1616, 1.0
        %v1619 = vrcp.pop %v1617
        %v1620 = vmul.f32 1.0, %v1619
        %v1621 = vrcp.pop %v1618
        %v1622 = vmul.f32 1.0, %v1621
        %v1625 = vcombine.low %v1620, %v1622
        %v1627 = vunpack.c.l.s4 1966171168
        %v1628 = vunpack.c.0.s8 %v1627
        %v1629 = vlaneseq
        %v1630 = vshrl.u32 %v1629, 7
        %v1631 = vsub.s32 %v1628, %v1630
        %v1632 = vrot.slane %v1625, %v1631
        %v1634 = vunpack.c.l.s4 1966171168
        %v1635 = vunpack.c.0.s8 %v1634
        %v1636 = vlaneseq
        %v1637 = vshrl.u32 %v1636, 7
        %v1638 = vsub.s32 %v1635, %v1637
        %v1639 = vrot.slane %v1632, %v1638
        %vm1641 = vcmp.lt.s32.totalorder %v301, 256
        %vm1642 = vmand %vm302, %vm1641
        %1643 = vst.msk [vmem:[%s201] sm:$0x3] %vm1642, %v1639
        %s1644 = sand.u32 %s98, 1
        %s1645 = scalar_lea.sflag [#allocation6], %s1644
        %s1646 = sand.u32 %s98, 1
        %s1647 = smul.addr %s1646, 2
        %s1648 = scalar_lea.vmem [#allocation9], %s1647
        // Predicated region
        $region41: #{tpu_custom_call.1} parent=31 // pred_check
          %p1649 = pneg %p108
        $region42: #{tpu_custom_call.1} parent=31 // pred_check_branch
          %1651 = sbr.rel (%p1649) target = $region44
        $region43: #{tpu_custom_call.1} parent=31 // pred_region
          %s1653 = ssub.s32 32, 32
          %1654 = vsyncadd %s1645, %s1653
          %s1655 = smul.addr %s22, 2
          %s1656 = smul.addr %s1655, 16
          %s1657 = scalar_lea.hbm %s3, %s1656
          %s1659 = sshll.u32 %s1648, 4
          %s1660 = int_to_ptr.vmem [resolvable:$true] %s1659
          %1662 = dma.vmem_to_hbm [thread:$0]  %s1660, 32, %s1657, %s1645
        $region44: #{tpu_custom_call.1} parent=31 // pred_fallthru
          _
      $region32: #{tpu_custom_call.1} parent=5 // pred_fallthru
        _
      %p1663 = scmp.le.s32.totalorder 2, %s17
      // Predicated region
      $region45: #{tpu_custom_call.1} parent=5 // pred_check
        %p1664 = pneg %p1663
      $region46: #{tpu_custom_call.1} parent=5 // pred_check_branch
        %1666 = sbr.rel (%p1664) target = $region48
      $region47: #{tpu_custom_call.1} parent=5 // pred_region
        %s1667 = ssub.s32 %s17, 2
        // Predicated region
        $region49: #{tpu_custom_call.1} parent=47 // pred_check
          %p1668 = pneg %p114
        $region50: #{tpu_custom_call.1} parent=47 // pred_check_branch
          %1670 = sbr.rel (%p1668) target = $region52
        $region51: #{tpu_custom_call.1} parent=47 // pred_region
          %s1671 = sand.u32 %s99, 1
          %s1672 = scalar_lea.sflag [#allocation6], %s1671
          %s1673 = sand.u32 %s99, 1
          %s1674 = smul.addr %s1673, 2
          %s1675 = scalar_lea.vmem [#allocation9], %s1674
          %1676 = dma.done %s1672, 32
        $region52: #{tpu_custom_call.1} parent=47 // pred_fallthru
          _
      $region48: #{tpu_custom_call.1} parent=5 // pred_fallthru
        _
    $region6: #{tpu_custom_call.1} parent=1 // loop_footer
      %s21 = sadd.s32 1, %s17
    $region7: #{tpu_custom_call.1} parent=1 // loop_footer_branch
      %16 = sbr.rel target = $region3
    $region8: #{tpu_custom_call.1} parent=1 // loop_exit
      _
    %1677 = vsyncpa [#allocation5], 1
    %s1678 = scalar_lea.sflag [#allocation5], 1
    %1679 = vsyncpa %s1678, 1
    %1680 = vsyncpa [#allocation6], 1
    %s1681 = scalar_lea.sflag [#allocation6], 1
    %1682 = vsyncpa %s1681, 1
    %1683 = vsyncpa [#allocation7], 1
    %s1684 = scalar_lea.sflag [#allocation7], 1
    %1685 = vsyncpa %s1684, 1

</llo_original>
